<compile_context>
chip_gen: v6e
topology: v6e:2x2x1
jax: 0.10.0
libtpu: 0.0.40
codegen_flags: <defaults>
</compile_context>

<pallas_src>
import jax
import jax.numpy as jnp
from jax.experimental import pallas as pl
from jax.experimental.pallas import tpu as pltpu

INPUT_SIZE = 7               # conv1 in_channels
CIN_PAD = 16                 # padded per-position channel block (lane-dense x)
SEQ_LEN = 8                  # L; LSTM input_size = 64 * L = 512
HIDDEN = 64
LSTM_IN = HIDDEN * SEQ_LEN   # 512
XCOLS = SEQ_LEN * CIN_PAD    # 128 (x tile lane width)
GCOLS = 6 * HIDDEN           # 384 = [i_f|i_r][g_f|g_r][o_f|o_r] (forget pruned)


# --------------------------------------------------------------------------
# kernel
# --------------------------------------------------------------------------
def _sharelayer_kernel(x_ref, w1_ref, b1_ref, w2_ref, b2_ref, wg_ref, bg_ref,
                       out_ref):
    # conv1 (k=1) as a block-diagonal lane-dense (tn,128)@(128,512); ReLU.
    h = jnp.dot(x_ref[...], w1_ref[...], preferred_element_type=jnp.float32)
    h = jnp.maximum(h + b1_ref[...], 0.0)
    # conv2 (k=1) block-diagonal (tn,512)@(512,512); ReLU.  col = l*64 + c
    h = jnp.dot(h.astype(jnp.bfloat16), w2_ref[...],
                preferred_element_type=jnp.float32)
    h = jnp.maximum(h + b2_ref[...], 0.0)                       # (tn, 512)
    # One fused matmul produces both directions' LSTM gates (W_hh term is
    # zero because h0 = 0; forget gate pruned because c0 = 0).  Columns are
    # pre-grouped as [i_f|i_r][g_f|g_r][o_f|o_r] -> 128-lane aligned slices.
    g = jnp.dot(h.astype(jnp.bfloat16), wg_ref[...],
                preferred_element_type=jnp.float32) + bg_ref[...]   # (tn, 384)
    i = jax.nn.sigmoid(g[:, 0:2 * HIDDEN])
    gg = jnp.tanh(g[:, 2 * HIDDEN:4 * HIDDEN])
    o = jax.nn.sigmoid(g[:, 4 * HIDDEN:6 * HIDDEN])
    # result is already in [h_fwd | h_rev] lane order -> one 128-lane store
    out_ref[...] = o * jnp.tanh(i * gg)


# --------------------------------------------------------------------------
# one-time parameter packing (host-side, out of the hot path)
# --------------------------------------------------------------------------
def _block_diag(w, n):
    return jax.scipy.linalg.block_diag(*([w] * n))


def _reorder_w_ih(w_ih):
    # PyTorch flatten index is c*L + l; kernel layout is l*64 + c.
    # (256, 512)[g, c*L + l]  ->  (512, 256)[l*64 + c, g]
    return (w_ih.reshape(4 * HIDDEN, HIDDEN, SEQ_LEN)
                 .transpose(2, 1, 0)
                 .reshape(SEQ_LEN * HIDDEN, 4 * HIDDEN))


def pack_params(params):
    """Pack PyTorch-layout params into kernel-ready arrays (call once)."""
    H = HIDDEN
    w1t = jnp.pad(params["w1"].T, ((0, CIN_PAD - INPUT_SIZE), (0, 0)))  # (16,64)
    w1_bd = _block_diag(w1t, SEQ_LEN)                          # (128, 512)
    b1 = jnp.tile(params["b1"], SEQ_LEN)[None, :]              # (1, 512)
    w2_bd = _block_diag(params["w2"].T, SEQ_LEN)               # (512, 512)
    b2 = jnp.tile(params["b2"], SEQ_LEN)[None, :]

    wf = _reorder_w_ih(params["w_ih_f"])                       # cols [i f g o]
    wr = _reorder_w_ih(params["w_ih_r"])
    # prune forget gate, group as [i_f|i_r][g_f|g_r][o_f|o_r]  -> (512, 384)
    wg = jnp.concatenate([wf[:, 0 * H:1 * H], wr[:, 0 * H:1 * H],
                          wf[:, 2 * H:3 * H], wr[:, 2 * H:3 * H],
                          wf[:, 3 * H:4 * H], wr[:, 3 * H:4 * H]], axis=1)
    bf = params["b_ih_f"] + params["b_hh_f"]
    br = params["b_ih_r"] + params["b_hh_r"]
    bg = jnp.concatenate([bf[0 * H:1 * H], br[0 * H:1 * H],
                          bf[2 * H:3 * H], br[2 * H:3 * H],
                          bf[3 * H:4 * H], br[3 * H:4 * H]])[None, :]  # (1,384)

    return {
        "w1_bd": w1_bd.astype(jnp.bfloat16),
        "b1": b1.astype(jnp.float32),
        "w2_bd": w2_bd.astype(jnp.bfloat16),
        "b2": b2.astype(jnp.float32),
        "wg": wg.astype(jnp.bfloat16),
        "bg": bg.astype(jnp.float32),
    }


# --------------------------------------------------------------------------
# forward
# --------------------------------------------------------------------------
def _round_up(a, m):
    return ((a + m - 1) // m) * m


def _pick_tn(n, cap=256):
    """Pick a batch tile: multiple of 8, >= 2 tiles (feeds both v7x TCs),
    <= cap rows per tile, and minimal padding."""
    n8 = _round_up(max(n, 8), 8)
    tiles = max(2, pl.cdiv(n8, cap))
    return max(8, _round_up(pl.cdiv(n8, tiles), 8))


def sharelayer_forward(x, packed, *, tn=None):
    """x: (N, L=8, C_in=7) float32, packed = pack_params(...) -> (N, 128)."""
    N, L, Cin = x.shape
    assert L == SEQ_LEN and Cin == INPUT_SIZE

    # Pad Cin 7 -> 16 so the x tile is lane-dense (128 columns); col = l*16+c.
    x_pad = jnp.pad(x, ((0, 0), (0, 0), (0, CIN_PAD - INPUT_SIZE)))
    x2d = x_pad.reshape(N, XCOLS).astype(jnp.bfloat16)

    if tn is None:
        tn = _pick_tn(N)
    else:
        tn = max(8, _round_up(min(int(tn), _round_up(N, 8)), 8))
    n_pad = _round_up(N, tn)
    if n_pad != N:
        x2d = jnp.pad(x2d, ((0, n_pad - N), (0, 0)))
    grid = (n_pad // tn,)

    const = lambda i: (0, 0)
    out = pl.pallas_call(
        _sharelayer_kernel,
        out_shape=jax.ShapeDtypeStruct((n_pad, 2 * HIDDEN), jnp.float32),
        grid=grid,
        in_specs=[
            pl.BlockSpec((tn, XCOLS), lambda i: (i, 0)),        # x tile
            pl.BlockSpec((XCOLS, LSTM_IN), const),              # conv1 block-diag
            pl.BlockSpec((1, LSTM_IN), const),                  # b1 (tiled)
            pl.BlockSpec((LSTM_IN, LSTM_IN), const),            # conv2 block-diag
            pl.BlockSpec((1, LSTM_IN), const),                  # b2 (tiled)
            pl.BlockSpec((LSTM_IN, GCOLS), const),              # fused gate weights
            pl.BlockSpec((1, GCOLS), const),                    # fused gate bias
        ],
        out_specs=pl.BlockSpec((tn, 2 * HIDDEN), lambda i: (i, 0)),
        compiler_params=pltpu.CompilerParams(
            dimension_semantics=("parallel",),
            vmem_limit_bytes=16 * 1024 * 1024),
    )(x2d, packed["w1_bd"], packed["b1"], packed["w2_bd"], packed["b2"],
      packed["wg"], packed["bg"])
    return out[:N]


# --------------------------------------------------------------------------
# reference + test
# --------------------------------------------------------------------------
def init_params(key):
    ks = jax.random.split(key, 10)
    s = 0.1
    return {
        "w1": s * jax.random.normal(ks[0], (HIDDEN, INPUT_SIZE), jnp.float32),
        "b1": s * jax.random.normal(ks[1], (HIDDEN,), jnp.float32),
        "w2": s * jax.random.normal(ks[2], (HIDDEN, HIDDEN), jnp.float32),
        "b2": s * jax.random.normal(ks[3], (HIDDEN,), jnp.float32),
        "w_ih_f": s * jax.random.normal(ks[4], (4 * HIDDEN, LSTM_IN), jnp.float32),
        "b_ih_f": s * jax.random.normal(ks[5], (4 * HIDDEN,), jnp.float32),
        "b_hh_f": s * jax.random.normal(ks[6], (4 * HIDDEN,), jnp.float32),
        "w_ih_r": s * jax.random.normal(ks[7], (4 * HIDDEN, LSTM_IN), jnp.float32),
        "b_ih_r": s * jax.random.normal(ks[8], (4 * HIDDEN,), jnp.float32),
        "b_hh_r": s * jax.random.normal(ks[9], (4 * HIDDEN,), jnp.float32),
        # W_hh_* omitted: with h0 = 0 their contribution is exactly 0.
    }


def sharelayer_reference(x, params):
    """Pure-JAX f32 reference mirroring the PyTorch forward (eval mode)."""
    N = x.shape[0]
    xt = jnp.transpose(x, (0, 2, 1))                              # (N, Cin, L)
    h = jnp.einsum("ncl,oc->nol", xt, params["w1"]) + params["b1"][None, :, None]
    h = jnp.maximum(h, 0.0)
    h = jnp.einsum("ncl,oc->nol", h, params["w2"]) + params["b2"][None, :, None]
    h = jnp.maximum(h, 0.0)                                       # (N, 64, L)
    x512 = h.reshape(N, -1)                                       # [c*L + l]

    def direction(w_ih, b_ih, b_hh):
        g = x512 @ w_ih.T + b_ih + b_hh
        i, f, gg, o = jnp.split(g, 4, axis=-1)
        c = jax.nn.sigmoid(i) * jnp.tanh(gg)                      # c0 = 0
        return jax.nn.sigmoid(o) * jnp.tanh(c)

    hf = direction(params["w_ih_f"], params["b_ih_f"], params["b_hh_f"])
    hr = direction(params["w_ih_r"], params["b_ih_r"], params["b_hh_r"])
    return jnp.concatenate([hf, hr], axis=-1)


if __name__ == "__main__":
    key = jax.random.PRNGKey(0)
    kx, kp = jax.random.split(key)

    # Module's __init__ pins the LSTM hidden-state batch to 72; h0/c0 are
    # zeros so the math is batch-agnostic — use N=72 to match the module.
    N = 72
    x = jax.random.normal(kx, (N, SEQ_LEN, INPUT_SIZE), jnp.float32)
    params = init_params(kp)

    packed = jax.tree_util.tree_map(jax.block_until_ready, pack_params(params))

    # Auto tn -> 40-row tiles, 2 grid steps (exercises the grid + padded rows).
    out = jax.block_until_ready(sharelayer_forward(x, packed))
    ref = jax.block_until_ready(sharelayer_reference(x, params))

    assert out.shape == (N, 2 * HIDDEN)
    err = float(jnp.max(jnp.abs(out - ref)))
    # bf16 MXU path vs f32 reference -> relaxed tolerance
    assert err < 3e-2, f"mismatch vs reference: max abs err {err}"

    print("KERNEL_OK")
</pallas_src>

<mosaic_0001>
module attributes {stable_mosaic.version = 11 : i64} {
  func.func @_sharelayer_kernel(%arg0: i32, %arg1: memref<40x128xbf16, #tpu.memory_space<vmem>>, %arg2: memref<128x512xbf16, #tpu.memory_space<vmem>>, %arg3: memref<1x512xf32, #tpu.memory_space<vmem>>, %arg4: memref<512x512xbf16, #tpu.memory_space<vmem>>, %arg5: memref<1x512xf32, #tpu.memory_space<vmem>>, %arg6: memref<512x384xbf16, #tpu.memory_space<vmem>>, %arg7: memref<1x384xf32, #tpu.memory_space<vmem>>, %arg8: memref<40x128xf32, #tpu.memory_space<vmem>>) attributes {dimension_semantics = [#tpu.dimension_semantics<parallel>], iteration_bounds = array<i64: 2>, scalar_prefetch = 0 : i64, scratch_operands = 0 : i64, tpu.core_type = #tpu.core_type<tc>, window_params = [{transform_indices = @transform_0, window_bounds = array<i64: 40, 128>}, {pipeline_mode = #tpu.pipeline_mode<synchronous>, transform_indices = @transform_1, window_bounds = array<i64: 128, 512>}, {pipeline_mode = #tpu.pipeline_mode<synchronous>, transform_indices = @transform_2, window_bounds = array<i64: 1, 512>}, {pipeline_mode = #tpu.pipeline_mode<synchronous>, transform_indices = @transform_3, window_bounds = array<i64: 512, 512>}, {pipeline_mode = #tpu.pipeline_mode<synchronous>, transform_indices = @transform_4, window_bounds = array<i64: 1, 512>}, {pipeline_mode = #tpu.pipeline_mode<synchronous>, transform_indices = @transform_5, window_bounds = array<i64: 512, 384>}, {pipeline_mode = #tpu.pipeline_mode<synchronous>, transform_indices = @transform_6, window_bounds = array<i64: 1, 384>}, {transform_indices = @transform_7, window_bounds = array<i64: 40, 128>}]} {
    %c0 = arith.constant 0 : index
    %c0_0 = arith.constant 0 : index
    %0 = vector.load %arg1[%c0, %c0_0] : memref<40x128xbf16, #tpu.memory_space<vmem>>, vector<40x128xbf16>
    %c0_1 = arith.constant 0 : index
    %c0_2 = arith.constant 0 : index
    %1 = vector.load %arg2[%c0_1, %c0_2] : memref<128x512xbf16, #tpu.memory_space<vmem>>, vector<128x512xbf16>
    %cst = arith.constant dense<0.000000e+00> : vector<40x512xf32>
    %2 = tpu.matmul %0, %1, %cst {dimension_numbers = #tpu.dot_dimension_numbers<[1], [0], [0], [1], [0, 0, 1, 1], [], []>} : vector<40x128xbf16>, vector<128x512xbf16>, vector<40x512xf32> -> vector<40x512xf32>
    %c0_3 = arith.constant 0 : index
    %c0_4 = arith.constant 0 : index
    %3 = vector.load %arg3[%c0_3, %c0_4] : memref<1x512xf32, #tpu.memory_space<vmem>>, vector<1x512xf32>
    %4 = vector.broadcast %3 : vector<1x512xf32> to vector<40x512xf32>
    %5 = arith.addf %2, %4 : vector<40x512xf32>
    %cst_5 = arith.constant 0.000000e+00 : f32
    %6 = vector.broadcast %cst_5 : f32 to vector<40x512xf32>
    %7 = arith.maximumf %5, %6 : vector<40x512xf32>
    %8 = arith.truncf %7 : vector<40x512xf32> to vector<40x512xbf16>
    %c0_6 = arith.constant 0 : index
    %c0_7 = arith.constant 0 : index
    %9 = vector.load %arg4[%c0_6, %c0_7] : memref<512x512xbf16, #tpu.memory_space<vmem>>, vector<512x512xbf16>
    %cst_8 = arith.constant dense<0.000000e+00> : vector<40x512xf32>
    %10 = tpu.matmul %8, %9, %cst_8 {dimension_numbers = #tpu.dot_dimension_numbers<[1], [0], [0], [1], [0, 0, 1, 1], [], []>} : vector<40x512xbf16>, vector<512x512xbf16>, vector<40x512xf32> -> vector<40x512xf32>
    %c0_9 = arith.constant 0 : index
    %c0_10 = arith.constant 0 : index
    %11 = vector.load %arg5[%c0_9, %c0_10] : memref<1x512xf32, #tpu.memory_space<vmem>>, vector<1x512xf32>
    %12 = vector.broadcast %11 : vector<1x512xf32> to vector<40x512xf32>
    %13 = arith.addf %10, %12 : vector<40x512xf32>
    %cst_11 = arith.constant 0.000000e+00 : f32
    %14 = vector.broadcast %cst_11 : f32 to vector<40x512xf32>
    %15 = arith.maximumf %13, %14 : vector<40x512xf32>
    %16 = arith.truncf %15 : vector<40x512xf32> to vector<40x512xbf16>
    %c0_12 = arith.constant 0 : index
    %c0_13 = arith.constant 0 : index
    %17 = vector.load %arg6[%c0_12, %c0_13] : memref<512x384xbf16, #tpu.memory_space<vmem>>, vector<512x384xbf16>
    %cst_14 = arith.constant dense<0.000000e+00> : vector<40x384xf32>
    %18 = tpu.matmul %16, %17, %cst_14 {dimension_numbers = #tpu.dot_dimension_numbers<[1], [0], [0], [1], [0, 0, 1, 1], [], []>} : vector<40x512xbf16>, vector<512x384xbf16>, vector<40x384xf32> -> vector<40x384xf32>
    %c0_15 = arith.constant 0 : index
    %c0_16 = arith.constant 0 : index
    %19 = vector.load %arg7[%c0_15, %c0_16] : memref<1x384xf32, #tpu.memory_space<vmem>>, vector<1x384xf32>
    %20 = vector.broadcast %19 : vector<1x384xf32> to vector<40x384xf32>
    %21 = arith.addf %18, %20 : vector<40x384xf32>
    %22 = vector.extract_strided_slice %21 {offsets = [0, 0], sizes = [40, 128], strides = [1, 1]} : vector<40x384xf32> to vector<40x128xf32>
    %23 = arith.negf %22 : vector<40x128xf32>
    %24 = math.exp %23 : vector<40x128xf32>
    %cst_17 = arith.constant 1.000000e+00 : f32
    %25 = vector.broadcast %cst_17 : f32 to vector<40x128xf32>
    %26 = arith.addf %25, %24 : vector<40x128xf32>
    %27 = arith.divf %25, %26 : vector<40x128xf32>
    %28 = vector.extract_strided_slice %21 {offsets = [0, 128], sizes = [40, 128], strides = [1, 1]} : vector<40x384xf32> to vector<40x128xf32>
    %29 = math.tanh %28 : vector<40x128xf32>
    %30 = vector.extract_strided_slice %21 {offsets = [0, 256], sizes = [40, 128], strides = [1, 1]} : vector<40x384xf32> to vector<40x128xf32>
    %31 = arith.negf %30 : vector<40x128xf32>
    %32 = math.exp %31 : vector<40x128xf32>
    %cst_18 = arith.constant 1.000000e+00 : f32
    %33 = vector.broadcast %cst_18 : f32 to vector<40x128xf32>
    %34 = arith.addf %33, %32 : vector<40x128xf32>
    %35 = arith.divf %33, %34 : vector<40x128xf32>
    %36 = arith.mulf %27, %29 : vector<40x128xf32>
    %37 = math.tanh %36 : vector<40x128xf32>
    %38 = arith.mulf %35, %37 : vector<40x128xf32>
    %c0_19 = arith.constant 0 : index
    %c0_20 = arith.constant 0 : index
    %39 = vector.load %arg8[%c0_19, %c0_20] : memref<40x128xf32, #tpu.memory_space<vmem>>, vector<40x128xf32>
    tpu.vector_store %arg8[%c0_19, %c0_20], %38 {strides = array<i32>} : memref<40x128xf32, #tpu.memory_space<vmem>>, vector<40x128xf32>,
    return
  }
  func.func @transform_0(%arg0: i32) -> (i32, i32) {
    %c0_i32 = arith.constant 0 : i32
    %c0_i32_0 = arith.constant 0 : i32
    return %arg0, %c0_i32 : i32, i32
  }
  func.func @transform_1(%arg0: i32) -> (i32, i32) {
    %c0_i32 = arith.constant 0 : i32
    %c0_i32_0 = arith.constant 0 : i32
    %c0_i32_1 = arith.constant 0 : i32
    return %c0_i32, %c0_i32_0 : i32, i32
  }
  func.func @transform_2(%arg0: i32) -> (i32, i32) {
    %c0_i32 = arith.constant 0 : i32
    %c0_i32_0 = arith.constant 0 : i32
    %c0_i32_1 = arith.constant 0 : i32
    return %c0_i32, %c0_i32_0 : i32, i32
  }
  func.func @transform_3(%arg0: i32) -> (i32, i32) {
    %c0_i32 = arith.constant 0 : i32
    %c0_i32_0 = arith.constant 0 : i32
    %c0_i32_1 = arith.constant 0 : i32
    return %c0_i32, %c0_i32_0 : i32, i32
  }
  func.func @transform_4(%arg0: i32) -> (i32, i32) {
    %c0_i32 = arith.constant 0 : i32
    %c0_i32_0 = arith.constant 0 : i32
    %c0_i32_1 = arith.constant 0 : i32
    return %c0_i32, %c0_i32_0 : i32, i32
  }
  func.func @transform_5(%arg0: i32) -> (i32, i32) {
    %c0_i32 = arith.constant 0 : i32
    %c0_i32_0 = arith.constant 0 : i32
    %c0_i32_1 = arith.constant 0 : i32
    return %c0_i32, %c0_i32_0 : i32, i32
  }
  func.func @transform_6(%arg0: i32) -> (i32, i32) {
    %c0_i32 = arith.constant 0 : i32
    %c0_i32_0 = arith.constant 0 : i32
    %c0_i32_1 = arith.constant 0 : i32
    return %c0_i32, %c0_i32_0 : i32, i32
  }
  func.func @transform_7(%arg0: i32) -> (i32, i32) {
    %c0_i32 = arith.constant 0 : i32
    %c0_i32_0 = arith.constant 0 : i32
    return %arg0, %c0_i32 : i32, i32
  }
}

</mosaic_0001>

<llo_original>
// kernel: tpu_custom_call.1
$region0: #{tpu_custom_call.1}
  #allocation0 [shape = 'u32[]', space=smem, size = 0x4, offset = 0x4, fixed_abs, tag = 'smem constant byte address 0x4 - core index']
  #allocation1 [shape = 'u32[144,128]{1,0:T(1,128)}', space=vmem, size = 0x12000, scoped, tag = 'internal scratch']
  %s0 = inlined_call_operand.hbm [shape: bf16[80,128], index: 0, kind: input, shape index: {}]
  %s1 = inlined_call_operand.hbm [shape: bf16[128,512], index: 1, kind: input, shape index: {}]
  %s2 = inlined_call_operand.hbm [shape: f32[1,512], index: 2, kind: input, shape index: {}]
  %s3 = inlined_call_operand.hbm [shape: bf16[512,512], index: 3, kind: input, shape index: {}]
  %s4 = inlined_call_operand.vmem [shape: f32[1,512], index: 4, kind: input, shape index: {}]
  %s5 = inlined_call_operand.hbm [shape: bf16[512,384], index: 5, kind: input, shape index: {}]
  %s6 = inlined_call_operand.vmem [shape: f32[1,384], index: 6, kind: input, shape index: {}]
  %s7 = inlined_call_operand.hbm [shape: f32[80,128], index: 7, kind: output, shape index: {}]
  %s8 = sld [smem:[#allocation0]]
  $region81: #{tpu_custom_call.1} parent=0
    _
  %s10 = ssub.s32 1, %s8
  %s11 = scalar_select 0, %s10, %s8
  $region1: #{tpu_custom_call.1} parent=0
    #allocation2 [shape = 'u8[20480]{0}', space=vmem, size = 0x5000, scoped, tag = 'input window, operand 0']
    #allocation3 [shape = 's32[2]{0}', space=sflag, size = 0x8, scoped, tag = 'scoped memory for tpu_custom_call.1']
    #allocation4 [shape = 's32[2]{0}', space=sflag, size = 0x8, scoped, tag = 'scoped memory for tpu_custom_call.1']
    #allocation5 [shape = 'u8[131072]{0}', space=vmem, size = 0x20000, scoped, tag = 'input window, operand 1, single buffered']
    #allocation6 [shape = 's32[1]{0}', space=sflag, size = 0x4, scoped, tag = 'scoped memory for tpu_custom_call.1']
    #allocation7 [shape = 'u8[2048]{0}', space=vmem, size = 0x800, scoped, tag = 'input window, operand 2, single buffered']
    #allocation8 [shape = 'u8[524288]{0}', space=vmem, size = 0x80000, scoped, tag = 'input window, operand 3, single buffered']
    #allocation9 [shape = 's32[1]{0}', space=sflag, size = 0x4, scoped, tag = 'scoped memory for tpu_custom_call.1']
    #allocation10 [shape = 'u8[393216]{0}', space=vmem, size = 0x60000, scoped, tag = 'input window, operand 5, single buffered']
    #allocation11 [shape = 'u8[40960]{0}', space=vmem, size = 0xa000, scoped, tag = 'output window, operand 0']
    %12 = vsyncpa [#allocation3], 0
    %s13 = scalar_lea.sflag [#allocation3], 1
    %14 = vsyncpa %s13, 0
    %15 = vsyncpa [#allocation6], 0
    %16 = vsyncpa [#allocation9], 0
    %17 = vsyncpa [#allocation4], 0
    %s18 = scalar_lea.sflag [#allocation4], 1
    %19 = vsyncpa %s18, 0
    loop: start=0, step=1, limit=4
    $region2: #{tpu_custom_call.1} parent=1 // loop_pre_header
      _
    $region3: #{tpu_custom_call.1} parent=1 // loop_header
      %s21 = sphi 0, %s25
      %p22 = scmp.ge.s32.totalorder %s21, 4
      %s31 = sphi 0, %s33
      %s34 = sphi 0, %s31
      %s35 = sphi 0, %s34
      %s51 = sphi 0, %s35
      %s55 = sphi 0, %s55
      %s57 = sphi 0, %s55
      %s58 = sphi 0, %s57
      %s72 = sphi 0, %s58
      %s76 = sphi 0, %s76
      %s78 = sphi 0, %s76
      %s79 = sphi 0, %s78
      %s93 = sphi 0, %s79
      %s97 = sphi 0, %s97
      %s99 = sphi 0, %s97
      %s100 = sphi 0, %s99
      %s114 = sphi 0, %s100
      %s118 = sphi 0, %s118
      %s120 = sphi 0, %s118
      %s121 = sphi 0, %s120
      %s135 = sphi 0, %s121
      %s139 = sphi 0, %s139
      %s141 = sphi 0, %s139
      %s142 = sphi 0, %s141
      %s156 = sphi 0, %s142
      %s160 = sphi 0, %s160
      %s162 = sphi 0, %s160
      %s163 = sphi 0, %s162
      %s177 = sphi 0, %s163
      %s183 = sphi 0, %s185
      %s186 = sphi 0, %s183
      %s187 = sphi 0, %s186
      %s203 = sphi 0, %s187
    $region4: #{tpu_custom_call.1} parent=1 // loop_header_branch
      %24 = sbr.rel (%p22) target = $region8
    $region5: #{tpu_custom_call.1} parent=1 // loop_body
      %s26 = ssub.s32 %s21, 1
      %s27 = ssub.s32 %s21, 2
      %s28 = sadd.s32 %s21, 1
      %s29 = ssub.s32 %s21, %s28
      %p30 = scmp.eq.s32.totalorder %s29, 0
      %s32 = sadd.s32 %s31, 1
      %s33 = scalar_select %p30, %s31, %s32
      %p36 = pneg %p30
      %p37 = scmp.eq.s32.totalorder %s21, 1
      %p38 = por %p36, %p37
      %p39 = scmp.ne.s32.totalorder %s31, %s34
      %p40 = scmp.eq.s32.totalorder %s21, 0
      %p41 = por %p39, %p40
      %p42 = scmp.ne.s32.totalorder %s31, %s34
      %p43 = scmp.eq.s32.totalorder %s26, 1
      %p44 = por %p42, %p43
      %p45 = scmp.ne.s32.totalorder %s34, %s35
      %p46 = scmp.eq.s32.totalorder %s26, 0
      %p47 = por %p45, %p46
      %p48 = scmp.ne.s32.totalorder %s34, %s35
      %p49 = scmp.eq.s32.totalorder %s27, 1
      %p50 = por %p48, %p49
      %p52 = scmp.ne.s32.totalorder %s35, %s51
      %p53 = scmp.eq.s32.totalorder %s27, 0
      %p54 = por %p52, %p53
      %s56 = sadd.s32 %s55, 1
      %p59 = scmp.eq.s32.totalorder %s21, 1
      %p60 = scmp.ne.s32.totalorder %s55, %s57
      %p61 = scmp.eq.s32.totalorder %s21, 0
      %p62 = por %p60, %p61
      %p63 = scmp.ne.s32.totalorder %s55, %s57
      %p64 = scmp.eq.s32.totalorder %s26, 1
      %p65 = por %p63, %p64
      %p66 = scmp.ne.s32.totalorder %s57, %s58
      %p67 = scmp.eq.s32.totalorder %s26, 0
      %p68 = por %p66, %p67
      %p69 = scmp.ne.s32.totalorder %s57, %s58
      %p70 = scmp.eq.s32.totalorder %s27, 1
      %p71 = por %p69, %p70
      %p73 = scmp.ne.s32.totalorder %s58, %s72
      %p74 = scmp.eq.s32.totalorder %s27, 0
      %p75 = por %p73, %p74
      %s77 = sadd.s32 %s76, 1
      %p80 = scmp.eq.s32.totalorder %s21, 1
      %p81 = scmp.ne.s32.totalorder %s76, %s78
      %p82 = scmp.eq.s32.totalorder %s21, 0
      %p83 = por %p81, %p82
      %p84 = scmp.ne.s32.totalorder %s76, %s78
      %p85 = scmp.eq.s32.totalorder %s26, 1
      %p86 = por %p84, %p85
      %p87 = scmp.ne.s32.totalorder %s78, %s79
      %p88 = scmp.eq.s32.totalorder %s26, 0
      %p89 = por %p87, %p88
      %p90 = scmp.ne.s32.totalorder %s78, %s79
      %p91 = scmp.eq.s32.totalorder %s27, 1
      %p92 = por %p90, %p91
      %p94 = scmp.ne.s32.totalorder %s79, %s93
      %p95 = scmp.eq.s32.totalorder %s27, 0
      %p96 = por %p94, %p95
      %s98 = sadd.s32 %s97, 1
      %p101 = scmp.eq.s32.totalorder %s21, 1
      %p102 = scmp.ne.s32.totalorder %s97, %s99
      %p103 = scmp.eq.s32.totalorder %s21, 0
      %p104 = por %p102, %p103
      %p105 = scmp.ne.s32.totalorder %s97, %s99
      %p106 = scmp.eq.s32.totalorder %s26, 1
      %p107 = por %p105, %p106
      %p108 = scmp.ne.s32.totalorder %s99, %s100
      %p109 = scmp.eq.s32.totalorder %s26, 0
      %p110 = por %p108, %p109
      %p111 = scmp.ne.s32.totalorder %s99, %s100
      %p112 = scmp.eq.s32.totalorder %s27, 1
      %p113 = por %p111, %p112
      %p115 = scmp.ne.s32.totalorder %s100, %s114
      %p116 = scmp.eq.s32.totalorder %s27, 0
      %p117 = por %p115, %p116
      %s119 = sadd.s32 %s118, 1
      %p122 = scmp.eq.s32.totalorder %s21, 1
      %p123 = scmp.ne.s32.totalorder %s118, %s120
      %p124 = scmp.eq.s32.totalorder %s21, 0
      %p125 = por %p123, %p124
      %p126 = scmp.ne.s32.totalorder %s118, %s120
      %p127 = scmp.eq.s32.totalorder %s26, 1
      %p128 = por %p126, %p127
      %p129 = scmp.ne.s32.totalorder %s120, %s121
      %p130 = scmp.eq.s32.totalorder %s26, 0
      %p131 = por %p129, %p130
      %p132 = scmp.ne.s32.totalorder %s120, %s121
      %p133 = scmp.eq.s32.totalorder %s27, 1
      %p134 = por %p132, %p133
      %p136 = scmp.ne.s32.totalorder %s121, %s135
      %p137 = scmp.eq.s32.totalorder %s27, 0
      %p138 = por %p136, %p137
      %s140 = sadd.s32 %s139, 1
      %p143 = scmp.eq.s32.totalorder %s21, 1
      %p144 = scmp.ne.s32.totalorder %s139, %s141
      %p145 = scmp.eq.s32.totalorder %s21, 0
      %p146 = por %p144, %p145
      %p147 = scmp.ne.s32.totalorder %s139, %s141
      %p148 = scmp.eq.s32.totalorder %s26, 1
      %p149 = por %p147, %p148
      %p150 = scmp.ne.s32.totalorder %s141, %s142
      %p151 = scmp.eq.s32.totalorder %s26, 0
      %p152 = por %p150, %p151
      %p153 = scmp.ne.s32.totalorder %s141, %s142
      %p154 = scmp.eq.s32.totalorder %s27, 1
      %p155 = por %p153, %p154
      %p157 = scmp.ne.s32.totalorder %s142, %s156
      %p158 = scmp.eq.s32.totalorder %s27, 0
      %p159 = por %p157, %p158
      %s161 = sadd.s32 %s160, 1
      %p164 = scmp.eq.s32.totalorder %s21, 1
      %p165 = scmp.ne.s32.totalorder %s160, %s162
      %p166 = scmp.eq.s32.totalorder %s21, 0
      %p167 = por %p165, %p166
      %p168 = scmp.ne.s32.totalorder %s160, %s162
      %p169 = scmp.eq.s32.totalorder %s26, 1
      %p170 = por %p168, %p169
      %p171 = scmp.ne.s32.totalorder %s162, %s163
      %p172 = scmp.eq.s32.totalorder %s26, 0
      %p173 = por %p171, %p172
      %p174 = scmp.ne.s32.totalorder %s162, %s163
      %p175 = scmp.eq.s32.totalorder %s27, 1
      %p176 = por %p174, %p175
      %p178 = scmp.ne.s32.totalorder %s163, %s177
      %p179 = scmp.eq.s32.totalorder %s27, 0
      %p180 = por %p178, %p179
      %s181 = ssub.s32 %s21, %s28
      %p182 = scmp.eq.s32.totalorder %s181, 0
      %s184 = sadd.s32 %s183, 1
      %s185 = scalar_select %p182, %s183, %s184
      %p188 = pneg %p182
      %p189 = scmp.eq.s32.totalorder %s21, 1
      %p190 = por %p188, %p189
      %p191 = scmp.ne.s32.totalorder %s183, %s186
      %p192 = scmp.eq.s32.totalorder %s21, 0
      %p193 = por %p191, %p192
      %p194 = scmp.ne.s32.totalorder %s183, %s186
      %p195 = scmp.eq.s32.totalorder %s26, 1
      %p196 = por %p194, %p195
      %p197 = scmp.ne.s32.totalorder %s186, %s187
      %p198 = scmp.eq.s32.totalorder %s26, 0
      %p199 = por %p197, %p198
      %p200 = scmp.ne.s32.totalorder %s186, %s187
      %p201 = scmp.eq.s32.totalorder %s27, 1
      %p202 = por %p200, %p201
      %p204 = scmp.ne.s32.totalorder %s187, %s203
      %p205 = scmp.eq.s32.totalorder %s27, 0
      %p206 = por %p204, %p205
      %p207 = scmp.le.s32.totalorder 1, %s21
      %p208 = scmp.lt.s32.totalorder %s21, 3
      %p209 = pnand %p207, %p208
      %p210 = pneg %p209
      // Predicated region
      $region9: #{tpu_custom_call.1} parent=5 // pred_check
        _
      $region10: #{tpu_custom_call.1} parent=5 // pred_check_branch
        %212 = sbr.rel (%p209) target = $region12
      $region11: #{tpu_custom_call.1} parent=5 // pred_region
        %s213 = ssub.s32 %s21, 1
        // Predicated region
        $region13: #{tpu_custom_call.1} parent=11 // pred_check
          %p214 = pneg %p68
        $region14: #{tpu_custom_call.1} parent=11 // pred_check_branch
          %216 = sbr.rel (%p214) target = $region16
        $region15: #{tpu_custom_call.1} parent=11 // pred_region
          %s218 = ssub.s32 4096, 4096
          %219 = vsyncadd [#allocation6], %s218
          %s220 = sshll.u32 [#allocation5], 4
          %s221 = int_to_ptr.vmem [resolvable:$true] %s220
          %226 = dma.hbm_to_vmem [thread:$0]  %s1, 4096, %s221, [#allocation6], 256, 256, 16
        $region16: #{tpu_custom_call.1} parent=11 // pred_fallthru
          _
        // Predicated region
        $region17: #{tpu_custom_call.1} parent=11 // pred_check
          %p227 = pneg %p89
        $region18: #{tpu_custom_call.1} parent=11 // pred_check_branch
          %229 = sbr.rel (%p227) target = $region20
        $region19: #{tpu_custom_call.1} parent=11 // pred_region
          %s231 = ssub.s32 64, 64
          %232 = vsyncadd [#allocation6], %s231
          %s234 = sshll.u32 [#allocation7], 4
          %s235 = int_to_ptr.vmem [resolvable:$true] %s234
          %237 = dma.hbm_to_vmem [thread:$0]  %s2, 64, %s235, [#allocation6]
        $region20: #{tpu_custom_call.1} parent=11 // pred_fallthru
          _
        // Predicated region
        $region21: #{tpu_custom_call.1} parent=11 // pred_check
          %p238 = pneg %p110
        $region22: #{tpu_custom_call.1} parent=11 // pred_check_branch
          %240 = sbr.rel (%p238) target = $region24
        $region23: #{tpu_custom_call.1} parent=11 // pred_region
          %s242 = ssub.s32 16384, 16384
          %243 = vsyncadd [#allocation9], %s242
          %s244 = sshll.u32 [#allocation8], 4
          %s245 = int_to_ptr.vmem [resolvable:$true] %s244
          %250 = dma.hbm_to_vmem [thread:$0]  %s3, 16384, %s245, [#allocation9], 256, 256, 16
        $region24: #{tpu_custom_call.1} parent=11 // pred_fallthru
          _
        // Predicated region
        $region25: #{tpu_custom_call.1} parent=11 // pred_check
          %p251 = pneg %p131
        $region26: #{tpu_custom_call.1} parent=11 // pred_check_branch
          %253 = sbr.rel (%p251) target = $region28
        $region27: #{tpu_custom_call.1} parent=11 // pred_region
          _
        $region28: #{tpu_custom_call.1} parent=11 // pred_fallthru
          _
        // Predicated region
        $region29: #{tpu_custom_call.1} parent=11 // pred_check
          %p254 = pneg %p152
        $region30: #{tpu_custom_call.1} parent=11 // pred_check_branch
          %256 = sbr.rel (%p254) target = $region32
        $region31: #{tpu_custom_call.1} parent=11 // pred_region
          %s258 = ssub.s32 12288, 12288
          %259 = vsyncadd [#allocation9], %s258
          %s260 = sshll.u32 [#allocation10], 4
          %s261 = int_to_ptr.vmem [resolvable:$true] %s260
          %266 = dma.hbm_to_vmem [thread:$0]  %s5, 12288, %s261, [#allocation9], 192, 192, 12
        $region32: #{tpu_custom_call.1} parent=11 // pred_fallthru
          _
        // Predicated region
        $region33: #{tpu_custom_call.1} parent=11 // pred_check
          %p267 = pneg %p173
        $region34: #{tpu_custom_call.1} parent=11 // pred_check_branch
          %269 = sbr.rel (%p267) target = $region36
        $region35: #{tpu_custom_call.1} parent=11 // pred_region
          _
        $region36: #{tpu_custom_call.1} parent=11 // pred_fallthru
          _
      $region12: #{tpu_custom_call.1} parent=5 // pred_fallthru
        _
      %p270 = scmp.lt.s32.totalorder %s21, 2
      // Predicated region
      $region37: #{tpu_custom_call.1} parent=5 // pred_check
        %p271 = pneg %p270
      $region38: #{tpu_custom_call.1} parent=5 // pred_check_branch
        %273 = sbr.rel (%p271) target = $region40
      $region39: #{tpu_custom_call.1} parent=5 // pred_region
        // Predicated region
        $region41: #{tpu_custom_call.1} parent=39 // pred_check
          %p274 = pneg %p41
        $region42: #{tpu_custom_call.1} parent=39 // pred_check_branch
          %276 = sbr.rel (%p274) target = $region44
        $region43: #{tpu_custom_call.1} parent=39 // pred_region
          %s277 = sand.u32 %s31, 1
          %s278 = scalar_lea.sflag [#allocation3], %s277
          %s279 = sand.u32 %s31, 1
          %s280 = smul.addr %s279, 20
          %s281 = scalar_lea.vmem [#allocation2], %s280
          %s282 = smul.u32 5, %s21
          %s284 = ssub.s32 320, 320
          %285 = vsyncadd %s278, %s284
          %s286 = smul.addr %s282, 64
          %s287 = scalar_lea.hbm %s0, %s286
          %s288 = sshll.u32 %s281, 4
          %s289 = int_to_ptr.vmem [resolvable:$true] %s288
          %294 = dma.hbm_to_vmem [thread:$0]  %s287, 320, %s289, %s278, 64, 64, 4
        $region44: #{tpu_custom_call.1} parent=39 // pred_fallthru
          _
      $region40: #{tpu_custom_call.1} parent=5 // pred_fallthru
        _
      %p295 = scmp.le.s32.totalorder 1, %s21
      %p296 = scmp.lt.s32.totalorder %s21, 3
      %p297 = pnand %p295, %p296
      %p298 = pneg %p297
      // Predicated region
      $region45: #{tpu_custom_call.1} parent=5 // pred_check
        _
      $region46: #{tpu_custom_call.1} parent=5 // pred_check_branch
        %300 = sbr.rel (%p297) target = $region48
      $region47: #{tpu_custom_call.1} parent=5 // pred_region
        %s301 = ssub.s32 %s21, 1
        %s302 = sand.u32 %s34, 1
        %s303 = scalar_lea.sflag [#allocation3], %s302
        %s304 = sand.u32 %s34, 1
        %s305 = smul.addr %s304, 20
        %s306 = scalar_lea.vmem [#allocation2], %s305
        // Predicated region
        $region49: #{tpu_custom_call.1} parent=47 // pred_check
          %p307 = pneg %p47
        $region50: #{tpu_custom_call.1} parent=47 // pred_check_branch
          %309 = sbr.rel (%p307) target = $region52
        $region51: #{tpu_custom_call.1} parent=47 // pred_region
          %310 = dma.done %s303, 320
        $region52: #{tpu_custom_call.1} parent=47 // pred_fallthru
          _
        // Predicated region
        $region53: #{tpu_custom_call.1} parent=47 // pred_check
          %p311 = pneg %p68
        $region54: #{tpu_custom_call.1} parent=47 // pred_check_branch
          %313 = sbr.rel (%p311) target = $region56
        $region55: #{tpu_custom_call.1} parent=47 // pred_region
          %314 = dma.done [#allocation6], 4096
        $region56: #{tpu_custom_call.1} parent=47 // pred_fallthru
          _
        // Predicated region
        $region57: #{tpu_custom_call.1} parent=47 // pred_check
          %p315 = pneg %p89
        $region58: #{tpu_custom_call.1} parent=47 // pred_check_branch
          %317 = sbr.rel (%p315) target = $region60
        $region59: #{tpu_custom_call.1} parent=47 // pred_region
          %318 = dma.done [#allocation6], 64
        $region60: #{tpu_custom_call.1} parent=47 // pred_fallthru
          _
        // Predicated region
        $region61: #{tpu_custom_call.1} parent=47 // pred_check
          %p319 = pneg %p110
        $region62: #{tpu_custom_call.1} parent=47 // pred_check_branch
          %321 = sbr.rel (%p319) target = $region64
        $region63: #{tpu_custom_call.1} parent=47 // pred_region
          %322 = dma.done [#allocation9], 16384
        $region64: #{tpu_custom_call.1} parent=47 // pred_fallthru
          _
        // Predicated region
        $region65: #{tpu_custom_call.1} parent=47 // pred_check
          %p323 = pneg %p152
        $region66: #{tpu_custom_call.1} parent=47 // pred_check_branch
          %325 = sbr.rel (%p323) target = $region68
        $region67: #{tpu_custom_call.1} parent=47 // pred_region
          %326 = dma.done [#allocation9], 12288
        $region68: #{tpu_custom_call.1} parent=47 // pred_fallthru
          _
        %s327 = sand.u32 %s34, 1
        %s328 = scalar_lea.sflag [#allocation3], %s327
        %s329 = sand.u32 %s34, 1
        %s330 = smul.addr %s329, 20
        %s331 = scalar_lea.vmem [#allocation2], %s330
        %p332 = pneg %p47
        %p333 = pneg %p44
        %p334 = pneg %p68
        %p335 = pneg %p65
        %p336 = pneg %p89
        %p337 = pneg %p86
        %p338 = pneg %p110
        %p339 = pneg %p107
        %p340 = pneg %p131
        %p341 = pneg %p128
        %p342 = pneg %p152
        %p343 = pneg %p149
        %p344 = pneg %p173
        %p345 = pneg %p170
        %p346 = pneg %p199
        %p347 = pneg %p196
        %s348 = sand.u32 %s186, 1
        %s349 = scalar_lea.sflag [#allocation4], %s348
        %s350 = sand.u32 %s186, 1
        %s351 = smul.addr %s350, 40
        %s352 = scalar_lea.vmem [#allocation11], %s351
        %s353 = smul.u32 5, %s26
        %s354 = smul.u32 5, %s26
        %v356 = vld [vmem:[%s306] sm:$0xf]
        %v357 = vld [vmem:[%s306 + $0x4] sm:$0xf]
        %v358 = vld [vmem:[%s306 + $0x8] sm:$0xf]
        %v359 = vld [vmem:[%s306 + $0xc] sm:$0xf]
        %v360 = vld [vmem:[%s306 + $0x10] sm:$0xf]
        %v361 = vld [vmem:[#allocation5] sm:$0xff]
        %v362 = vld [vmem:[#allocation5 + $0x8] sm:$0xff]
        %v363 = vld [vmem:[#allocation5 + $0x10] sm:$0xff]
        %v364 = vld [vmem:[#allocation5 + $0x18] sm:$0xff]
        %v365 = vld [vmem:[#allocation5 + $0x20] sm:$0xff]
        %v366 = vld [vmem:[#allocation5 + $0x28] sm:$0xff]
        %v367 = vld [vmem:[#allocation5 + $0x30] sm:$0xff]
        %v368 = vld [vmem:[#allocation5 + $0x38] sm:$0xff]
        %v369 = vld [vmem:[#allocation5 + $0x40] sm:$0xff]
        %v370 = vld [vmem:[#allocation5 + $0x48] sm:$0xff]
        %v371 = vld [vmem:[#allocation5 + $0x50] sm:$0xff]
        %v372 = vld [vmem:[#allocation5 + $0x58] sm:$0xff]
        %v373 = vld [vmem:[#allocation5 + $0x60] sm:$0xff]
        %v374 = vld [vmem:[#allocation5 + $0x68] sm:$0xff]
        %v375 = vld [vmem:[#allocation5 + $0x70] sm:$0xff]
        %v376 = vld [vmem:[#allocation5 + $0x78] sm:$0xff]
        %v377 = vld [vmem:[#allocation5 + $0x80] sm:$0xff]
        %v378 = vld [vmem:[#allocation5 + $0x88] sm:$0xff]
        %v379 = vld [vmem:[#allocation5 + $0x90] sm:$0xff]
        %v380 = vld [vmem:[#allocation5 + $0x98] sm:$0xff]
        %v381 = vld [vmem:[#allocation5 + $0xa0] sm:$0xff]
        %v382 = vld [vmem:[#allocation5 + $0xa8] sm:$0xff]
        %v383 = vld [vmem:[#allocation5 + $0xb0] sm:$0xff]
        %v384 = vld [vmem:[#allocation5 + $0xb8] sm:$0xff]
        %v385 = vld [vmem:[#allocation5 + $0xc0] sm:$0xff]
        %v386 = vld [vmem:[#allocation5 + $0xc8] sm:$0xff]
        %v387 = vld [vmem:[#allocation5 + $0xd0] sm:$0xff]
        %v388 = vld [vmem:[#allocation5 + $0xd8] sm:$0xff]
        %v389 = vld [vmem:[#allocation5 + $0xe0] sm:$0xff]
        %v390 = vld [vmem:[#allocation5 + $0xe8] sm:$0xff]
        %v391 = vld [vmem:[#allocation5 + $0xf0] sm:$0xff]
        %v392 = vld [vmem:[#allocation5 + $0xf8] sm:$0xff]
        %v393 = vld [vmem:[#allocation7] sm:$0xf]
        %v395 = vlaneseq
        %v396 = vshrl.u32 %v395, 7
        %v397 = vsub.s32 0, %v396
        %v398 = vrot.slane %v393, %v397
        %v399 = vlaneseq
        %v400 = vshrl.u32 %v399, 7
        %v401 = vsub.s32 1, %v400
        %v402 = vrot.slane %v393, %v401
        %v403 = vlaneseq
        %v404 = vshrl.u32 %v403, 7
        %v405 = vsub.s32 2, %v404
        %v406 = vrot.slane %v393, %v405
        %v407 = vlaneseq
        %v408 = vshrl.u32 %v407, 7
        %v409 = vsub.s32 3, %v408
        %v410 = vrot.slane %v393, %v409
        %v420 = vunpack.c.l.b16 %v356
        %v421 = vunpack.c.l.b16 %v357
        %v422 = vunpack.c.l.b16 %v358
        %v423 = vunpack.c.l.b16 %v359
        %v424 = vunpack.c.l.b16 %v360
        %v425 = vpack.c.b16 %v421, %v420
        %v426 = vpack.c.b16 %v423, %v422
        %v427 = vpack.c.b16 %v424, %v424
        %v463 = vunpack.c.l.b16 %v361
        %v464 = vunpack.c.h.b16 %v361
        %v465 = vunpack.c.l.b16 %v362
        %v466 = vunpack.c.h.b16 %v362
        %v467 = vunpack.c.l.b16 %v363
        %v468 = vunpack.c.h.b16 %v363
        %v469 = vunpack.c.l.b16 %v364
        %v470 = vunpack.c.h.b16 %v364
        %v471 = vunpack.c.l.b16 %v365
        %v472 = vunpack.c.h.b16 %v365
        %v473 = vunpack.c.l.b16 %v366
        %v474 = vunpack.c.h.b16 %v366
        %v475 = vunpack.c.l.b16 %v367
        %v476 = vunpack.c.h.b16 %v367
        %v477 = vunpack.c.l.b16 %v368
        %v478 = vunpack.c.h.b16 %v368
        %v479 = vunpack.c.l.b16 %v369
        %v480 = vunpack.c.h.b16 %v369
        %v481 = vunpack.c.l.b16 %v370
        %v482 = vunpack.c.h.b16 %v370
        %v483 = vunpack.c.l.b16 %v371
        %v484 = vunpack.c.h.b16 %v371
        %v485 = vunpack.c.l.b16 %v372
        %v486 = vunpack.c.h.b16 %v372
        %v487 = vunpack.c.l.b16 %v373
        %v488 = vunpack.c.h.b16 %v373
        %v489 = vunpack.c.l.b16 %v374
        %v490 = vunpack.c.h.b16 %v374
        %v491 = vunpack.c.l.b16 %v375
        %v492 = vunpack.c.h.b16 %v375
        %v493 = vunpack.c.l.b16 %v376
        %v494 = vunpack.c.h.b16 %v376
        %v495 = vunpack.c.l.b16 %v377
        %v496 = vunpack.c.h.b16 %v377
        %v497 = vunpack.c.l.b16 %v378
        %v498 = vunpack.c.h.b16 %v378
        %v499 = vunpack.c.l.b16 %v379
        %v500 = vunpack.c.h.b16 %v379
        %v501 = vunpack.c.l.b16 %v380
        %v502 = vunpack.c.h.b16 %v380
        %v503 = vunpack.c.l.b16 %v381
        %v504 = vunpack.c.h.b16 %v381
        %v505 = vunpack.c.l.b16 %v382
        %v506 = vunpack.c.h.b16 %v382
        %v507 = vunpack.c.l.b16 %v383
        %v508 = vunpack.c.h.b16 %v383
        %v509 = vunpack.c.l.b16 %v384
        %v510 = vunpack.c.h.b16 %v384
        %v511 = vunpack.c.l.b16 %v385
        %v512 = vunpack.c.h.b16 %v385
        %v513 = vunpack.c.l.b16 %v386
        %v514 = vunpack.c.h.b16 %v386
        %v515 = vunpack.c.l.b16 %v387
        %v516 = vunpack.c.h.b16 %v387
        %v517 = vunpack.c.l.b16 %v388
        %v518 = vunpack.c.h.b16 %v388
        %v519 = vunpack.c.l.b16 %v389
        %v520 = vunpack.c.h.b16 %v389
        %v521 = vunpack.c.l.b16 %v390
        %v522 = vunpack.c.h.b16 %v390
        %v523 = vunpack.c.l.b16 %v391
        %v524 = vunpack.c.h.b16 %v391
        %v525 = vunpack.c.l.b16 %v392
        %v526 = vunpack.c.h.b16 %v392
        %v527 = vpack.c.b16 %v467, %v463
        %v528 = vpack.c.b16 %v468, %v464
        %v529 = vpack.c.b16 %v469, %v465
        %v530 = vpack.c.b16 %v470, %v466
        %v531 = vpack.c.b16 %v475, %v471
        %v532 = vpack.c.b16 %v476, %v472
        %v533 = vpack.c.b16 %v477, %v473
        %v534 = vpack.c.b16 %v478, %v474
        %v535 = vpack.c.b16 %v483, %v479
        %v536 = vpack.c.b16 %v484, %v480
        %v537 = vpack.c.b16 %v485, %v481
        %v538 = vpack.c.b16 %v486, %v482
        %v539 = vpack.c.b16 %v491, %v487
        %v540 = vpack.c.b16 %v492, %v488
        %v541 = vpack.c.b16 %v493, %v489
        %v542 = vpack.c.b16 %v494, %v490
        %v543 = vpack.c.b16 %v499, %v495
        %v544 = vpack.c.b16 %v500, %v496
        %v545 = vpack.c.b16 %v501, %v497
        %v546 = vpack.c.b16 %v502, %v498
        %v547 = vpack.c.b16 %v507, %v503
        %v548 = vpack.c.b16 %v508, %v504
        %v549 = vpack.c.b16 %v509, %v505
        %v550 = vpack.c.b16 %v510, %v506
        %v551 = vpack.c.b16 %v515, %v511
        %v552 = vpack.c.b16 %v516, %v512
        %v553 = vpack.c.b16 %v517, %v513
        %v554 = vpack.c.b16 %v518, %v514
        %v555 = vpack.c.b16 %v523, %v519
        %v556 = vpack.c.b16 %v524, %v520
        %v557 = vpack.c.b16 %v525, %v521
        %v558 = vpack.c.b16 %v526, %v522
        %591 = vmatprep.subr.bf16.mxu0 %v556
        %592 = vmatpush1.bf16.msra.mxu0 %v555
        %593 = vmatprep.subr.bf16.mxu0 %v552
        %594 = vmatpush1.bf16.msra.mxu0 %v551
        %595 = vmatprep.subr.bf16.mxu0 %v548
        %596 = vmatpush1.bf16.msra.mxu0 %v547
        %597 = vmatprep.subr.bf16.mxu0 %v544
        %598 = vmatpush1.bf16.msra.mxu0 %v543
        %599 = vmatprep.subr.bf16.mxu0 %v540
        %600 = vmatpush1.bf16.msra.mxu0 %v539
        %601 = vmatprep.subr.bf16.mxu0 %v536
        %602 = vmatpush1.bf16.msra.mxu0 %v535
        %603 = vmatprep.subr.bf16.mxu0 %v532
        %604 = vmatpush1.bf16.msra.mxu0 %v531
        %605 = vmatprep.subr.bf16.mxu0 %v528
        %606 = vmatpush1.bf16.msra.mxu0 %v527
        %607 = vmatprep.subr.bf16.mxu0 0
        %608 = vmatpush2.bf16.msra.mxu0 0
        %609 = vmatprep.subr.bf16.mxu0 0
        %610 = vmatpush2.bf16.msra.mxu0 0
        %611 = vmatprep.subr.bf16.mxu0 0
        %612 = vmatpush2.bf16.msra.mxu0 0
        %613 = vmatprep.subr.bf16.mxu0 0
        %614 = vmatpush2.bf16.msra.mxu0 0
        %615 = vmatprep.subr.bf16.mxu0 0
        %616 = vmatpush2.bf16.msra.mxu0 0
        %617 = vmatprep.subr.bf16.mxu0 0
        %618 = vmatpush2.bf16.msra.mxu0 0
        %619 = vmatprep.subr.bf16.mxu0 0
        %620 = vmatpush2.bf16.msra.mxu0 0
        %621 = vmatprep.subr.bf16.mxu0 0
        %622 = vmatpush2.bf16.msra.mxu0 0
        %623 = vmatprep.mubr.bf16.mxu0 0
        %624 = vmatmul.mubr.bf16.gmra.mxu0 %v425
        %v625 = vpop.f32.mrf.mxu0
        %v626 = vadd.f32 %v398, %v625
        %v627 = vpop.f32.mrf.mxu0
        %v628 = vadd.f32 %v402, %v627
        %v629 = vpop.f32.mrf.mxu0
        %v630 = vadd.f32 %v398, %v629
        %v631 = vpop.f32.mrf.mxu0
        %v632 = vadd.f32 %v402, %v631
        %633 = vmatprep.mubr.bf16.mxu0 0
        %634 = vmatmul.mubr.bf16.gmra.mxu0 %v426
        %v635 = vpop.f32.mrf.mxu0
        %v636 = vadd.f32 %v398, %v635
        %v637 = vpop.f32.mrf.mxu0
        %v638 = vadd.f32 %v402, %v637
        %v639 = vpop.f32.mrf.mxu0
        %v640 = vadd.f32 %v398, %v639
        %v641 = vpop.f32.mrf.mxu0
        %v642 = vadd.f32 %v402, %v641
        %643 = vmatprep.mubr.bf16.mxu0 0
        %644 = vmatmul.mubr.bf16.gmra.mxu0 %v427
        %v645 = vpop.f32.mrf.mxu0
        %v646 = vadd.f32 %v398, %v645
        %v647 = vpop.f32.mrf.mxu0
        %v648 = vadd.f32 %v402, %v647
        %v649 = vpop.f32.mrf.mxu0
        %v650 = vpop.f32.mrf.mxu0
        %651 = vdwg.mxu0
        %652 = vmatprep.subr.bf16.mxu0 %v558
        %653 = vmatpush1.bf16.msra.mxu0 %v557
        %654 = vmatprep.subr.bf16.mxu0 %v554
        %655 = vmatpush1.bf16.msra.mxu0 %v553
        %656 = vmatprep.subr.bf16.mxu0 %v550
        %657 = vmatpush1.bf16.msra.mxu0 %v549
        %658 = vmatprep.subr.bf16.mxu0 %v546
        %659 = vmatpush1.bf16.msra.mxu0 %v545
        %660 = vmatprep.subr.bf16.mxu0 %v542
        %661 = vmatpush1.bf16.msra.mxu0 %v541
        %662 = vmatprep.subr.bf16.mxu0 %v538
        %663 = vmatpush1.bf16.msra.mxu0 %v537
        %664 = vmatprep.subr.bf16.mxu0 %v534
        %665 = vmatpush1.bf16.msra.mxu0 %v533
        %666 = vmatprep.subr.bf16.mxu0 %v530
        %667 = vmatpush1.bf16.msra.mxu0 %v529
        %668 = vmatprep.subr.bf16.mxu0 0
        %669 = vmatpush2.bf16.msra.mxu0 0
        %670 = vmatprep.subr.bf16.mxu0 0
        %671 = vmatpush2.bf16.msra.mxu0 0
        %672 = vmatprep.subr.bf16.mxu0 0
        %673 = vmatpush2.bf16.msra.mxu0 0
        %674 = vmatprep.subr.bf16.mxu0 0
        %675 = vmatpush2.bf16.msra.mxu0 0
        %676 = vmatprep.subr.bf16.mxu0 0
        %677 = vmatpush2.bf16.msra.mxu0 0
        %678 = vmatprep.subr.bf16.mxu0 0
        %679 = vmatpush2.bf16.msra.mxu0 0
        %680 = vmatprep.subr.bf16.mxu0 0
        %681 = vmatpush2.bf16.msra.mxu0 0
        %682 = vmatprep.subr.bf16.mxu0 0
        %683 = vmatpush2.bf16.msra.mxu0 0
        %684 = vmatprep.mubr.bf16.mxu0 0
        %685 = vmatmul.mubr.bf16.gmra.mxu0 %v425
        %v686 = vpop.f32.mrf.mxu0
        %v687 = vadd.f32 %v406, %v686
        %v688 = vpop.f32.mrf.mxu0
        %v689 = vadd.f32 %v410, %v688
        %v690 = vpop.f32.mrf.mxu0
        %v691 = vadd.f32 %v406, %v690
        %v692 = vpop.f32.mrf.mxu0
        %v693 = vadd.f32 %v410, %v692
        %694 = vmatprep.mubr.bf16.mxu0 0
        %695 = vmatmul.mubr.bf16.gmra.mxu0 %v426
        %v696 = vpop.f32.mrf.mxu0
        %v697 = vadd.f32 %v406, %v696
        %v698 = vpop.f32.mrf.mxu0
        %v699 = vadd.f32 %v410, %v698
        %v700 = vpop.f32.mrf.mxu0
        %v701 = vadd.f32 %v406, %v700
        %v702 = vpop.f32.mrf.mxu0
        %v703 = vadd.f32 %v410, %v702
        %704 = vmatprep.mubr.bf16.mxu0 0
        %705 = vmatmul.mubr.bf16.gmra.mxu0 %v427
        %v706 = vpop.f32.mrf.mxu0
        %v707 = vadd.f32 %v406, %v706
        %v708 = vpop.f32.mrf.mxu0
        %v709 = vadd.f32 %v410, %v708
        %v710 = vpop.f32.mrf.mxu0
        %v711 = vpop.f32.mrf.mxu0
        %712 = vdwg.mxu0
        %v713 = vmax.f32 %v626, 0.0
        %v714 = vmax.f32 %v628, 0.0
        %v715 = vmax.f32 %v687, 0.0
        %v716 = vmax.f32 %v689, 0.0
        %v717 = vmax.f32 %v630, 0.0
        %v718 = vmax.f32 %v632, 0.0
        %v719 = vmax.f32 %v691, 0.0
        %v720 = vmax.f32 %v693, 0.0
        %v721 = vmax.f32 %v636, 0.0
        %v722 = vmax.f32 %v638, 0.0
        %v723 = vmax.f32 %v697, 0.0
        %v724 = vmax.f32 %v699, 0.0
        %v725 = vmax.f32 %v640, 0.0
        %v726 = vmax.f32 %v642, 0.0
        %v727 = vmax.f32 %v701, 0.0
        %v728 = vmax.f32 %v703, 0.0
        %v729 = vmax.f32 %v646, 0.0
        %v730 = vmax.f32 %v648, 0.0
        %v731 = vmax.f32 %v707, 0.0
        %v732 = vmax.f32 %v709, 0.0
        %v733 = vpack.c.bf16 %v717, %v713
        %v734 = vpack.c.bf16 %v718, %v714
        %v735 = vpack.c.bf16 %v719, %v715
        %v736 = vpack.c.bf16 %v720, %v716
        %v737 = vpack.c.bf16 %v725, %v721
        %v738 = vpack.c.bf16 %v726, %v722
        %v739 = vpack.c.bf16 %v727, %v723
        %v740 = vpack.c.bf16 %v728, %v724
        %v741 = vpack.c.bf16 %v729, %v729
        %v742 = vpack.c.bf16 %v730, %v730
        %v743 = vpack.c.bf16 %v731, %v731
        %v744 = vpack.c.bf16 %v732, %v732
        %v745 = vld [vmem:[#allocation8] sm:$0xff]
        %v746 = vld [vmem:[#allocation8 + $0x8] sm:$0xff]
        %v747 = vld [vmem:[#allocation8 + $0x10] sm:$0xff]
        %v748 = vld [vmem:[#allocation8 + $0x18] sm:$0xff]
        %v749 = vld [vmem:[#allocation8 + $0x20] sm:$0xff]
        %v750 = vld [vmem:[#allocation8 + $0x28] sm:$0xff]
        %v751 = vld [vmem:[#allocation8 + $0x30] sm:$0xff]
        %v752 = vld [vmem:[#allocation8 + $0x38] sm:$0xff]
        %v753 = vld [vmem:[#allocation8 + $0x40] sm:$0xff]
        %v754 = vld [vmem:[#allocation8 + $0x48] sm:$0xff]
        %v755 = vld [vmem:[#allocation8 + $0x50] sm:$0xff]
        %v756 = vld [vmem:[#allocation8 + $0x58] sm:$0xff]
        %v757 = vld [vmem:[#allocation8 + $0x60] sm:$0xff]
        %v758 = vld [vmem:[#allocation8 + $0x68] sm:$0xff]
        %v759 = vld [vmem:[#allocation8 + $0x70] sm:$0xff]
        %v760 = vld [vmem:[#allocation8 + $0x78] sm:$0xff]
        %v761 = vld [vmem:[#allocation8 + $0x80] sm:$0xff]
        %v762 = vld [vmem:[#allocation8 + $0x88] sm:$0xff]
        %v763 = vld [vmem:[#allocation8 + $0x90] sm:$0xff]
        %v764 = vld [vmem:[#allocation8 + $0x98] sm:$0xff]
        %v765 = vld [vmem:[#allocation8 + $0xa0] sm:$0xff]
        %v766 = vld [vmem:[#allocation8 + $0xa8] sm:$0xff]
        %v767 = vld [vmem:[#allocation8 + $0xb0] sm:$0xff]
        %v768 = vld [vmem:[#allocation8 + $0xb8] sm:$0xff]
        %v769 = vld [vmem:[#allocation8 + $0xc0] sm:$0xff]
        %v770 = vld [vmem:[#allocation8 + $0xc8] sm:$0xff]
        %v771 = vld [vmem:[#allocation8 + $0xd0] sm:$0xff]
        %v772 = vld [vmem:[#allocation8 + $0xd8] sm:$0xff]
        %v773 = vld [vmem:[#allocation8 + $0xe0] sm:$0xff]
        %v774 = vld [vmem:[#allocation8 + $0xe8] sm:$0xff]
        %v775 = vld [vmem:[#allocation8 + $0xf0] sm:$0xff]
        %v776 = vld [vmem:[#allocation8 + $0xf8] sm:$0xff]
        %v777 = vld [vmem:[#allocation8 + $0x100] sm:$0xff]
        %v778 = vld [vmem:[#allocation8 + $0x108] sm:$0xff]
        %v779 = vld [vmem:[#allocation8 + $0x110] sm:$0xff]
        %v780 = vld [vmem:[#allocation8 + $0x118] sm:$0xff]
        %v781 = vld [vmem:[#allocation8 + $0x120] sm:$0xff]
        %v782 = vld [vmem:[#allocation8 + $0x128] sm:$0xff]
        %v783 = vld [vmem:[#allocation8 + $0x130] sm:$0xff]
        %v784 = vld [vmem:[#allocation8 + $0x138] sm:$0xff]
        %v785 = vld [vmem:[#allocation8 + $0x140] sm:$0xff]
        %v786 = vld [vmem:[#allocation8 + $0x148] sm:$0xff]
        %v787 = vld [vmem:[#allocation8 + $0x150] sm:$0xff]
        %v788 = vld [vmem:[#allocation8 + $0x158] sm:$0xff]
        %v789 = vld [vmem:[#allocation8 + $0x160] sm:$0xff]
        %v790 = vld [vmem:[#allocation8 + $0x168] sm:$0xff]
        %v791 = vld [vmem:[#allocation8 + $0x170] sm:$0xff]
        %v792 = vld [vmem:[#allocation8 + $0x178] sm:$0xff]
        %v793 = vld [vmem:[#allocation8 + $0x180] sm:$0xff]
        %v794 = vld [vmem:[#allocation8 + $0x188] sm:$0xff]
        %v795 = vld [vmem:[#allocation8 + $0x190] sm:$0xff]
        %v796 = vld [vmem:[#allocation8 + $0x198] sm:$0xff]
        %v797 = vld [vmem:[#allocation8 + $0x1a0] sm:$0xff]
        %v798 = vld [vmem:[#allocation8 + $0x1a8] sm:$0xff]
        %v799 = vld [vmem:[#allocation8 + $0x1b0] sm:$0xff]
        %v800 = vld [vmem:[#allocation8 + $0x1b8] sm:$0xff]
        %v801 = vld [vmem:[#allocation8 + $0x1c0] sm:$0xff]
        %v802 = vld [vmem:[#allocation8 + $0x1c8] sm:$0xff]
        %v803 = vld [vmem:[#allocation8 + $0x1d0] sm:$0xff]
        %v804 = vld [vmem:[#allocation8 + $0x1d8] sm:$0xff]
        %v805 = vld [vmem:[#allocation8 + $0x1e0] sm:$0xff]
        %v806 = vld [vmem:[#allocation8 + $0x1e8] sm:$0xff]
        %v807 = vld [vmem:[#allocation8 + $0x1f0] sm:$0xff]
        %v808 = vld [vmem:[#allocation8 + $0x1f8] sm:$0xff]
        %v809 = vld [vmem:[#allocation8 + $0x200] sm:$0xff]
        %v810 = vld [vmem:[#allocation8 + $0x208] sm:$0xff]
        %v811 = vld [vmem:[#allocation8 + $0x210] sm:$0xff]
        %v812 = vld [vmem:[#allocation8 + $0x218] sm:$0xff]
        %v813 = vld [vmem:[#allocation8 + $0x220] sm:$0xff]
        %v814 = vld [vmem:[#allocation8 + $0x228] sm:$0xff]
        %v815 = vld [vmem:[#allocation8 + $0x230] sm:$0xff]
        %v816 = vld [vmem:[#allocation8 + $0x238] sm:$0xff]
        %v817 = vld [vmem:[#allocation8 + $0x240] sm:$0xff]
        %v818 = vld [vmem:[#allocation8 + $0x248] sm:$0xff]
        %v819 = vld [vmem:[#allocation8 + $0x250] sm:$0xff]
        %v820 = vld [vmem:[#allocation8 + $0x258] sm:$0xff]
        %v821 = vld [vmem:[#allocation8 + $0x260] sm:$0xff]
        %v822 = vld [vmem:[#allocation8 + $0x268] sm:$0xff]
        %v823 = vld [vmem:[#allocation8 + $0x270] sm:$0xff]
        %v824 = vld [vmem:[#allocation8 + $0x278] sm:$0xff]
        %v825 = vld [vmem:[#allocation8 + $0x280] sm:$0xff]
        %v826 = vld [vmem:[#allocation8 + $0x288] sm:$0xff]
        %v827 = vld [vmem:[#allocation8 + $0x290] sm:$0xff]
        %v828 = vld [vmem:[#allocation8 + $0x298] sm:$0xff]
        %v829 = vld [vmem:[#allocation8 + $0x2a0] sm:$0xff]
        %v830 = vld [vmem:[#allocation8 + $0x2a8] sm:$0xff]
        %v831 = vld [vmem:[#allocation8 + $0x2b0] sm:$0xff]
        %v832 = vld [vmem:[#allocation8 + $0x2b8] sm:$0xff]
        %v833 = vld [vmem:[#allocation8 + $0x2c0] sm:$0xff]
        %v834 = vld [vmem:[#allocation8 + $0x2c8] sm:$0xff]
        %v835 = vld [vmem:[#allocation8 + $0x2d0] sm:$0xff]
        %v836 = vld [vmem:[#allocation8 + $0x2d8] sm:$0xff]
        %v837 = vld [vmem:[#allocation8 + $0x2e0] sm:$0xff]
        %v838 = vld [vmem:[#allocation8 + $0x2e8] sm:$0xff]
        %v839 = vld [vmem:[#allocation8 + $0x2f0] sm:$0xff]
        %v840 = vld [vmem:[#allocation8 + $0x2f8] sm:$0xff]
        %v841 = vld [vmem:[#allocation8 + $0x300] sm:$0xff]
        %v842 = vld [vmem:[#allocation8 + $0x308] sm:$0xff]
        %v843 = vld [vmem:[#allocation8 + $0x310] sm:$0xff]
        %v844 = vld [vmem:[#allocation8 + $0x318] sm:$0xff]
        %v845 = vld [vmem:[#allocation8 + $0x320] sm:$0xff]
        %v846 = vld [vmem:[#allocation8 + $0x328] sm:$0xff]
        %v847 = vld [vmem:[#allocation8 + $0x330] sm:$0xff]
        %v848 = vld [vmem:[#allocation8 + $0x338] sm:$0xff]
        %v849 = vld [vmem:[#allocation8 + $0x340] sm:$0xff]
        %v850 = vld [vmem:[#allocation8 + $0x348] sm:$0xff]
        %v851 = vld [vmem:[#allocation8 + $0x350] sm:$0xff]
        %v852 = vld [vmem:[#allocation8 + $0x358] sm:$0xff]
        %v853 = vld [vmem:[#allocation8 + $0x360] sm:$0xff]
        %v854 = vld [vmem:[#allocation8 + $0x368] sm:$0xff]
        %v855 = vld [vmem:[#allocation8 + $0x370] sm:$0xff]
        %v856 = vld [vmem:[#allocation8 + $0x378] sm:$0xff]
        %v857 = vld [vmem:[#allocation8 + $0x380] sm:$0xff]
        %v858 = vld [vmem:[#allocation8 + $0x388] sm:$0xff]
        %v859 = vld [vmem:[#allocation8 + $0x390] sm:$0xff]
        %v860 = vld [vmem:[#allocation8 + $0x398] sm:$0xff]
        %v861 = vld [vmem:[#allocation8 + $0x3a0] sm:$0xff]
        %v862 = vld [vmem:[#allocation8 + $0x3a8] sm:$0xff]
        %v863 = vld [vmem:[#allocation8 + $0x3b0] sm:$0xff]
        %v864 = vld [vmem:[#allocation8 + $0x3b8] sm:$0xff]
        %v865 = vld [vmem:[#allocation8 + $0x3c0] sm:$0xff]
        %v866 = vld [vmem:[#allocation8 + $0x3c8] sm:$0xff]
        %v867 = vld [vmem:[#allocation8 + $0x3d0] sm:$0xff]
        %v868 = vld [vmem:[#allocation8 + $0x3d8] sm:$0xff]
        %v869 = vld [vmem:[#allocation8 + $0x3e0] sm:$0xff]
        %v870 = vld [vmem:[#allocation8 + $0x3e8] sm:$0xff]
        %v871 = vld [vmem:[#allocation8 + $0x3f0] sm:$0xff]
        %v872 = vld [vmem:[#allocation8 + $0x3f8] sm:$0xff]
        %v873 = vld [vmem:[%s4] sm:$0xf]
        %v875 = vlaneseq
        %v876 = vshrl.u32 %v875, 7
        %v877 = vsub.s32 0, %v876
        %v878 = vrot.slane %v873, %v877
        %v879 = vlaneseq
        %v880 = vshrl.u32 %v879, 7
        %v881 = vsub.s32 1, %v880
        %v882 = vrot.slane %v873, %v881
        %v883 = vlaneseq
        %v884 = vshrl.u32 %v883, 7
        %v885 = vsub.s32 2, %v884
        %v886 = vrot.slane %v873, %v885
        %v887 = vlaneseq
        %v888 = vshrl.u32 %v887, 7
        %v889 = vsub.s32 3, %v888
        %v890 = vrot.slane %v873, %v889
        %v1023 = vunpack.c.l.b16 %v745
        %v1024 = vunpack.c.h.b16 %v745
        %v1025 = vunpack.c.l.b16 %v746
        %v1026 = vunpack.c.h.b16 %v746
        %v1027 = vunpack.c.l.b16 %v747
        %v1028 = vunpack.c.h.b16 %v747
        %v1029 = vunpack.c.l.b16 %v748
        %v1030 = vunpack.c.h.b16 %v748
        %v1031 = vunpack.c.l.b16 %v749
        %v1032 = vunpack.c.h.b16 %v749
        %v1033 = vunpack.c.l.b16 %v750
        %v1034 = vunpack.c.h.b16 %v750
        %v1035 = vunpack.c.l.b16 %v751
        %v1036 = vunpack.c.h.b16 %v751
        %v1037 = vunpack.c.l.b16 %v752
        %v1038 = vunpack.c.h.b16 %v752
        %v1039 = vunpack.c.l.b16 %v753
        %v1040 = vunpack.c.h.b16 %v753
        %v1041 = vunpack.c.l.b16 %v754
        %v1042 = vunpack.c.h.b16 %v754
        %v1043 = vunpack.c.l.b16 %v755
        %v1044 = vunpack.c.h.b16 %v755
        %v1045 = vunpack.c.l.b16 %v756
        %v1046 = vunpack.c.h.b16 %v756
        %v1047 = vunpack.c.l.b16 %v757
        %v1048 = vunpack.c.h.b16 %v757
        %v1049 = vunpack.c.l.b16 %v758
        %v1050 = vunpack.c.h.b16 %v758
        %v1051 = vunpack.c.l.b16 %v759
        %v1052 = vunpack.c.h.b16 %v759
        %v1053 = vunpack.c.l.b16 %v760
        %v1054 = vunpack.c.h.b16 %v760
        %v1055 = vunpack.c.l.b16 %v761
        %v1056 = vunpack.c.h.b16 %v761
        %v1057 = vunpack.c.l.b16 %v762
        %v1058 = vunpack.c.h.b16 %v762
        %v1059 = vunpack.c.l.b16 %v763
        %v1060 = vunpack.c.h.b16 %v763
        %v1061 = vunpack.c.l.b16 %v764
        %v1062 = vunpack.c.h.b16 %v764
        %v1063 = vunpack.c.l.b16 %v765
        %v1064 = vunpack.c.h.b16 %v765
        %v1065 = vunpack.c.l.b16 %v766
        %v1066 = vunpack.c.h.b16 %v766
        %v1067 = vunpack.c.l.b16 %v767
        %v1068 = vunpack.c.h.b16 %v767
        %v1069 = vunpack.c.l.b16 %v768
        %v1070 = vunpack.c.h.b16 %v768
        %v1071 = vunpack.c.l.b16 %v769
        %v1072 = vunpack.c.h.b16 %v769
        %v1073 = vunpack.c.l.b16 %v770
        %v1074 = vunpack.c.h.b16 %v770
        %v1075 = vunpack.c.l.b16 %v771
        %v1076 = vunpack.c.h.b16 %v771
        %v1077 = vunpack.c.l.b16 %v772
        %v1078 = vunpack.c.h.b16 %v772
        %v1079 = vunpack.c.l.b16 %v773
        %v1080 = vunpack.c.h.b16 %v773
        %v1081 = vunpack.c.l.b16 %v774
        %v1082 = vunpack.c.h.b16 %v774
        %v1083 = vunpack.c.l.b16 %v775
        %v1084 = vunpack.c.h.b16 %v775
        %v1085 = vunpack.c.l.b16 %v776
        %v1086 = vunpack.c.h.b16 %v776
        %v1087 = vunpack.c.l.b16 %v777
        %v1088 = vunpack.c.h.b16 %v777
        %v1089 = vunpack.c.l.b16 %v778
        %v1090 = vunpack.c.h.b16 %v778
        %v1091 = vunpack.c.l.b16 %v779
        %v1092 = vunpack.c.h.b16 %v779
        %v1093 = vunpack.c.l.b16 %v780
        %v1094 = vunpack.c.h.b16 %v780
        %v1095 = vunpack.c.l.b16 %v781
        %v1096 = vunpack.c.h.b16 %v781
        %v1097 = vunpack.c.l.b16 %v782
        %v1098 = vunpack.c.h.b16 %v782
        %v1099 = vunpack.c.l.b16 %v783
        %v1100 = vunpack.c.h.b16 %v783
        %v1101 = vunpack.c.l.b16 %v784
        %v1102 = vunpack.c.h.b16 %v784
        %v1103 = vunpack.c.l.b16 %v785
        %v1104 = vunpack.c.h.b16 %v785
        %v1105 = vunpack.c.l.b16 %v786
        %v1106 = vunpack.c.h.b16 %v786
        %v1107 = vunpack.c.l.b16 %v787
        %v1108 = vunpack.c.h.b16 %v787
        %v1109 = vunpack.c.l.b16 %v788
        %v1110 = vunpack.c.h.b16 %v788
        %v1111 = vunpack.c.l.b16 %v789
        %v1112 = vunpack.c.h.b16 %v789
        %v1113 = vunpack.c.l.b16 %v790
        %v1114 = vunpack.c.h.b16 %v790
        %v1115 = vunpack.c.l.b16 %v791
        %v1116 = vunpack.c.h.b16 %v791
        %v1117 = vunpack.c.l.b16 %v792
        %v1118 = vunpack.c.h.b16 %v792
        %v1119 = vunpack.c.l.b16 %v793
        %v1120 = vunpack.c.h.b16 %v793
        %v1121 = vunpack.c.l.b16 %v794
        %v1122 = vunpack.c.h.b16 %v794
        %v1123 = vunpack.c.l.b16 %v795
        %v1124 = vunpack.c.h.b16 %v795
        %v1125 = vunpack.c.l.b16 %v796
        %v1126 = vunpack.c.h.b16 %v796
        %v1127 = vunpack.c.l.b16 %v797
        %v1128 = vunpack.c.h.b16 %v797
        %v1129 = vunpack.c.l.b16 %v798
        %v1130 = vunpack.c.h.b16 %v798
        %v1131 = vunpack.c.l.b16 %v799
        %v1132 = vunpack.c.h.b16 %v799
        %v1133 = vunpack.c.l.b16 %v800
        %v1134 = vunpack.c.h.b16 %v800
        %v1135 = vunpack.c.l.b16 %v801
        %v1136 = vunpack.c.h.b16 %v801
        %v1137 = vunpack.c.l.b16 %v802
        %v1138 = vunpack.c.h.b16 %v802
        %v1139 = vunpack.c.l.b16 %v803
        %v1140 = vunpack.c.h.b16 %v803
        %v1141 = vunpack.c.l.b16 %v804
        %v1142 = vunpack.c.h.b16 %v804
        %v1143 = vunpack.c.l.b16 %v805
        %v1144 = vunpack.c.h.b16 %v805
        %v1145 = vunpack.c.l.b16 %v806
        %v1146 = vunpack.c.h.b16 %v806
        %v1147 = vunpack.c.l.b16 %v807
        %v1148 = vunpack.c.h.b16 %v807
        %v1149 = vunpack.c.l.b16 %v808
        %v1150 = vunpack.c.h.b16 %v808
        %v1151 = vunpack.c.l.b16 %v809
        %v1152 = vunpack.c.h.b16 %v809
        %v1153 = vunpack.c.l.b16 %v810
        %v1154 = vunpack.c.h.b16 %v810
        %v1155 = vunpack.c.l.b16 %v811
        %v1156 = vunpack.c.h.b16 %v811
        %v1157 = vunpack.c.l.b16 %v812
        %v1158 = vunpack.c.h.b16 %v812
        %v1159 = vunpack.c.l.b16 %v813
        %v1160 = vunpack.c.h.b16 %v813
        %v1161 = vunpack.c.l.b16 %v814
        %v1162 = vunpack.c.h.b16 %v814
        %v1163 = vunpack.c.l.b16 %v815
        %v1164 = vunpack.c.h.b16 %v815
        %v1165 = vunpack.c.l.b16 %v816
        %v1166 = vunpack.c.h.b16 %v816
        %v1167 = vunpack.c.l.b16 %v817
        %v1168 = vunpack.c.h.b16 %v817
        %v1169 = vunpack.c.l.b16 %v818
        %v1170 = vunpack.c.h.b16 %v818
        %v1171 = vunpack.c.l.b16 %v819
        %v1172 = vunpack.c.h.b16 %v819
        %v1173 = vunpack.c.l.b16 %v820
        %v1174 = vunpack.c.h.b16 %v820
        %v1175 = vunpack.c.l.b16 %v821
        %v1176 = vunpack.c.h.b16 %v821
        %v1177 = vunpack.c.l.b16 %v822
        %v1178 = vunpack.c.h.b16 %v822
        %v1179 = vunpack.c.l.b16 %v823
        %v1180 = vunpack.c.h.b16 %v823
        %v1181 = vunpack.c.l.b16 %v824
        %v1182 = vunpack.c.h.b16 %v824
        %v1183 = vunpack.c.l.b16 %v825
        %v1184 = vunpack.c.h.b16 %v825
        %v1185 = vunpack.c.l.b16 %v826
        %v1186 = vunpack.c.h.b16 %v826
        %v1187 = vunpack.c.l.b16 %v827
        %v1188 = vunpack.c.h.b16 %v827
        %v1189 = vunpack.c.l.b16 %v828
        %v1190 = vunpack.c.h.b16 %v828
        %v1191 = vunpack.c.l.b16 %v829
        %v1192 = vunpack.c.h.b16 %v829
        %v1193 = vunpack.c.l.b16 %v830
        %v1194 = vunpack.c.h.b16 %v830
        %v1195 = vunpack.c.l.b16 %v831
        %v1196 = vunpack.c.h.b16 %v831
        %v1197 = vunpack.c.l.b16 %v832
        %v1198 = vunpack.c.h.b16 %v832
        %v1199 = vunpack.c.l.b16 %v833
        %v1200 = vunpack.c.h.b16 %v833
        %v1201 = vunpack.c.l.b16 %v834
        %v1202 = vunpack.c.h.b16 %v834
        %v1203 = vunpack.c.l.b16 %v835
        %v1204 = vunpack.c.h.b16 %v835
        %v1205 = vunpack.c.l.b16 %v836
        %v1206 = vunpack.c.h.b16 %v836
        %v1207 = vunpack.c.l.b16 %v837
        %v1208 = vunpack.c.h.b16 %v837
        %v1209 = vunpack.c.l.b16 %v838
        %v1210 = vunpack.c.h.b16 %v838
        %v1211 = vunpack.c.l.b16 %v839
        %v1212 = vunpack.c.h.b16 %v839
        %v1213 = vunpack.c.l.b16 %v840
        %v1214 = vunpack.c.h.b16 %v840
        %v1215 = vunpack.c.l.b16 %v841
        %v1216 = vunpack.c.h.b16 %v841
        %v1217 = vunpack.c.l.b16 %v842
        %v1218 = vunpack.c.h.b16 %v842
        %v1219 = vunpack.c.l.b16 %v843
        %v1220 = vunpack.c.h.b16 %v843
        %v1221 = vunpack.c.l.b16 %v844
        %v1222 = vunpack.c.h.b16 %v844
        %v1223 = vunpack.c.l.b16 %v845
        %v1224 = vunpack.c.h.b16 %v845
        %v1225 = vunpack.c.l.b16 %v846
        %v1226 = vunpack.c.h.b16 %v846
        %v1227 = vunpack.c.l.b16 %v847
        %v1228 = vunpack.c.h.b16 %v847
        %v1229 = vunpack.c.l.b16 %v848
        %v1230 = vunpack.c.h.b16 %v848
        %v1231 = vunpack.c.l.b16 %v849
        %v1232 = vunpack.c.h.b16 %v849
        %v1233 = vunpack.c.l.b16 %v850
        %v1234 = vunpack.c.h.b16 %v850
        %v1235 = vunpack.c.l.b16 %v851
        %v1236 = vunpack.c.h.b16 %v851
        %v1237 = vunpack.c.l.b16 %v852
        %v1238 = vunpack.c.h.b16 %v852
        %v1239 = vunpack.c.l.b16 %v853
        %v1240 = vunpack.c.h.b16 %v853
        %v1241 = vunpack.c.l.b16 %v854
        %v1242 = vunpack.c.h.b16 %v854
        %v1243 = vunpack.c.l.b16 %v855
        %v1244 = vunpack.c.h.b16 %v855
        %v1245 = vunpack.c.l.b16 %v856
        %v1246 = vunpack.c.h.b16 %v856
        %v1247 = vunpack.c.l.b16 %v857
        %v1248 = vunpack.c.h.b16 %v857
        %v1249 = vunpack.c.l.b16 %v858
        %v1250 = vunpack.c.h.b16 %v858
        %v1251 = vunpack.c.l.b16 %v859
        %v1252 = vunpack.c.h.b16 %v859
        %v1253 = vunpack.c.l.b16 %v860
        %v1254 = vunpack.c.h.b16 %v860
        %v1255 = vunpack.c.l.b16 %v861
        %v1256 = vunpack.c.h.b16 %v861
        %v1257 = vunpack.c.l.b16 %v862
        %v1258 = vunpack.c.h.b16 %v862
        %v1259 = vunpack.c.l.b16 %v863
        %v1260 = vunpack.c.h.b16 %v863
        %v1261 = vunpack.c.l.b16 %v864
        %v1262 = vunpack.c.h.b16 %v864
        %v1263 = vunpack.c.l.b16 %v865
        %v1264 = vunpack.c.h.b16 %v865
        %v1265 = vunpack.c.l.b16 %v866
        %v1266 = vunpack.c.h.b16 %v866
        %v1267 = vunpack.c.l.b16 %v867
        %v1268 = vunpack.c.h.b16 %v867
        %v1269 = vunpack.c.l.b16 %v868
        %v1270 = vunpack.c.h.b16 %v868
        %v1271 = vunpack.c.l.b16 %v869
        %v1272 = vunpack.c.h.b16 %v869
        %v1273 = vunpack.c.l.b16 %v870
        %v1274 = vunpack.c.h.b16 %v870
        %v1275 = vunpack.c.l.b16 %v871
        %v1276 = vunpack.c.h.b16 %v871
        %v1277 = vunpack.c.l.b16 %v872
        %v1278 = vunpack.c.h.b16 %v872
        %v1279 = vpack.c.b16 %v1027, %v1023
        %v1280 = vpack.c.b16 %v1028, %v1024
        %v1281 = vpack.c.b16 %v1029, %v1025
        %v1282 = vpack.c.b16 %v1030, %v1026
        %v1283 = vpack.c.b16 %v1035, %v1031
        %v1284 = vpack.c.b16 %v1036, %v1032
        %v1285 = vpack.c.b16 %v1037, %v1033
        %v1286 = vpack.c.b16 %v1038, %v1034
        %v1287 = vpack.c.b16 %v1043, %v1039
        %v1288 = vpack.c.b16 %v1044, %v1040
        %v1289 = vpack.c.b16 %v1045, %v1041
        %v1290 = vpack.c.b16 %v1046, %v1042
        %v1291 = vpack.c.b16 %v1051, %v1047
        %v1292 = vpack.c.b16 %v1052, %v1048
        %v1293 = vpack.c.b16 %v1053, %v1049
        %v1294 = vpack.c.b16 %v1054, %v1050
        %v1295 = vpack.c.b16 %v1059, %v1055
        %v1296 = vpack.c.b16 %v1060, %v1056
        %v1297 = vpack.c.b16 %v1061, %v1057
        %v1298 = vpack.c.b16 %v1062, %v1058
        %v1299 = vpack.c.b16 %v1067, %v1063
        %v1300 = vpack.c.b16 %v1068, %v1064
        %v1301 = vpack.c.b16 %v1069, %v1065
        %v1302 = vpack.c.b16 %v1070, %v1066
        %v1303 = vpack.c.b16 %v1075, %v1071
        %v1304 = vpack.c.b16 %v1076, %v1072
        %v1305 = vpack.c.b16 %v1077, %v1073
        %v1306 = vpack.c.b16 %v1078, %v1074
        %v1307 = vpack.c.b16 %v1083, %v1079
        %v1308 = vpack.c.b16 %v1084, %v1080
        %v1309 = vpack.c.b16 %v1085, %v1081
        %v1310 = vpack.c.b16 %v1086, %v1082
        %v1311 = vpack.c.b16 %v1091, %v1087
        %v1312 = vpack.c.b16 %v1092, %v1088
        %v1313 = vpack.c.b16 %v1093, %v1089
        %v1314 = vpack.c.b16 %v1094, %v1090
        %v1315 = vpack.c.b16 %v1099, %v1095
        %v1316 = vpack.c.b16 %v1100, %v1096
        %v1317 = vpack.c.b16 %v1101, %v1097
        %v1318 = vpack.c.b16 %v1102, %v1098
        %v1319 = vpack.c.b16 %v1107, %v1103
        %v1320 = vpack.c.b16 %v1108, %v1104
        %v1321 = vpack.c.b16 %v1109, %v1105
        %v1322 = vpack.c.b16 %v1110, %v1106
        %v1323 = vpack.c.b16 %v1115, %v1111
        %v1324 = vpack.c.b16 %v1116, %v1112
        %v1325 = vpack.c.b16 %v1117, %v1113
        %v1326 = vpack.c.b16 %v1118, %v1114
        %v1327 = vpack.c.b16 %v1123, %v1119
        %v1328 = vpack.c.b16 %v1124, %v1120
        %v1329 = vpack.c.b16 %v1125, %v1121
        %v1330 = vpack.c.b16 %v1126, %v1122
        %v1331 = vpack.c.b16 %v1131, %v1127
        %v1332 = vpack.c.b16 %v1132, %v1128
        %v1333 = vpack.c.b16 %v1133, %v1129
        %v1334 = vpack.c.b16 %v1134, %v1130
        %v1335 = vpack.c.b16 %v1139, %v1135
        %v1336 = vpack.c.b16 %v1140, %v1136
        %v1337 = vpack.c.b16 %v1141, %v1137
        %v1338 = vpack.c.b16 %v1142, %v1138
        %v1339 = vpack.c.b16 %v1147, %v1143
        %v1340 = vpack.c.b16 %v1148, %v1144
        %v1341 = vpack.c.b16 %v1149, %v1145
        %v1342 = vpack.c.b16 %v1150, %v1146
        %v1343 = vpack.c.b16 %v1155, %v1151
        %v1344 = vpack.c.b16 %v1156, %v1152
        %v1345 = vpack.c.b16 %v1157, %v1153
        %v1346 = vpack.c.b16 %v1158, %v1154
        %v1347 = vpack.c.b16 %v1163, %v1159
        %v1348 = vpack.c.b16 %v1164, %v1160
        %v1349 = vpack.c.b16 %v1165, %v1161
        %v1350 = vpack.c.b16 %v1166, %v1162
        %v1351 = vpack.c.b16 %v1171, %v1167
        %v1352 = vpack.c.b16 %v1172, %v1168
        %v1353 = vpack.c.b16 %v1173, %v1169
        %v1354 = vpack.c.b16 %v1174, %v1170
        %v1355 = vpack.c.b16 %v1179, %v1175
        %v1356 = vpack.c.b16 %v1180, %v1176
        %v1357 = vpack.c.b16 %v1181, %v1177
        %v1358 = vpack.c.b16 %v1182, %v1178
        %v1359 = vpack.c.b16 %v1187, %v1183
        %v1360 = vpack.c.b16 %v1188, %v1184
        %v1361 = vpack.c.b16 %v1189, %v1185
        %v1362 = vpack.c.b16 %v1190, %v1186
        %v1363 = vpack.c.b16 %v1195, %v1191
        %v1364 = vpack.c.b16 %v1196, %v1192
        %v1365 = vpack.c.b16 %v1197, %v1193
        %v1366 = vpack.c.b16 %v1198, %v1194
        %v1367 = vpack.c.b16 %v1203, %v1199
        %v1368 = vpack.c.b16 %v1204, %v1200
        %v1369 = vpack.c.b16 %v1205, %v1201
        %v1370 = vpack.c.b16 %v1206, %v1202
        %v1371 = vpack.c.b16 %v1211, %v1207
        %v1372 = vpack.c.b16 %v1212, %v1208
        %v1373 = vpack.c.b16 %v1213, %v1209
        %v1374 = vpack.c.b16 %v1214, %v1210
        %v1375 = vpack.c.b16 %v1219, %v1215
        %v1376 = vpack.c.b16 %v1220, %v1216
        %v1377 = vpack.c.b16 %v1221, %v1217
        %v1378 = vpack.c.b16 %v1222, %v1218
        %v1379 = vpack.c.b16 %v1227, %v1223
        %v1380 = vpack.c.b16 %v1228, %v1224
        %v1381 = vpack.c.b16 %v1229, %v1225
        %v1382 = vpack.c.b16 %v1230, %v1226
        %v1383 = vpack.c.b16 %v1235, %v1231
        %v1384 = vpack.c.b16 %v1236, %v1232
        %v1385 = vpack.c.b16 %v1237, %v1233
        %v1386 = vpack.c.b16 %v1238, %v1234
        %v1387 = vpack.c.b16 %v1243, %v1239
        %v1388 = vpack.c.b16 %v1244, %v1240
        %v1389 = vpack.c.b16 %v1245, %v1241
        %v1390 = vpack.c.b16 %v1246, %v1242
        %v1391 = vpack.c.b16 %v1251, %v1247
        %v1392 = vpack.c.b16 %v1252, %v1248
        %v1393 = vpack.c.b16 %v1253, %v1249
        %v1394 = vpack.c.b16 %v1254, %v1250
        %v1395 = vpack.c.b16 %v1259, %v1255
        %v1396 = vpack.c.b16 %v1260, %v1256
        %v1397 = vpack.c.b16 %v1261, %v1257
        %v1398 = vpack.c.b16 %v1262, %v1258
        %v1399 = vpack.c.b16 %v1267, %v1263
        %v1400 = vpack.c.b16 %v1268, %v1264
        %v1401 = vpack.c.b16 %v1269, %v1265
        %v1402 = vpack.c.b16 %v1270, %v1266
        %v1403 = vpack.c.b16 %v1275, %v1271
        %v1404 = vpack.c.b16 %v1276, %v1272
        %v1405 = vpack.c.b16 %v1277, %v1273
        %v1406 = vpack.c.b16 %v1278, %v1274
        %1535 = vmatprep.subr.bf16.mxu0 %v1308
        %1536 = vmatpush1.bf16.msra.mxu0 %v1307
        %1537 = vmatprep.subr.bf16.mxu0 %v1304
        %1538 = vmatpush1.bf16.msra.mxu0 %v1303
        %1539 = vmatprep.subr.bf16.mxu0 %v1300
        %1540 = vmatpush1.bf16.msra.mxu0 %v1299
        %1541 = vmatprep.subr.bf16.mxu0 %v1296
        %1542 = vmatpush1.bf16.msra.mxu0 %v1295
        %1543 = vmatprep.subr.bf16.mxu0 %v1292
        %1544 = vmatpush1.bf16.msra.mxu0 %v1291
        %1545 = vmatprep.subr.bf16.mxu0 %v1288
        %1546 = vmatpush1.bf16.msra.mxu0 %v1287
        %1547 = vmatprep.subr.bf16.mxu0 %v1284
        %1548 = vmatpush1.bf16.msra.mxu0 %v1283
        %1549 = vmatprep.subr.bf16.mxu0 %v1280
        %1550 = vmatpush1.bf16.msra.mxu0 %v1279
        %1551 = vmatprep.subr.bf16.mxu0 %v1340
        %1552 = vmatpush2.bf16.msra.mxu0 %v1339
        %1553 = vmatprep.subr.bf16.mxu0 %v1336
        %1554 = vmatpush2.bf16.msra.mxu0 %v1335
        %1555 = vmatprep.subr.bf16.mxu0 %v1332
        %1556 = vmatpush2.bf16.msra.mxu0 %v1331
        %1557 = vmatprep.subr.bf16.mxu0 %v1328
        %1558 = vmatpush2.bf16.msra.mxu0 %v1327
        %1559 = vmatprep.subr.bf16.mxu0 %v1324
        %1560 = vmatpush2.bf16.msra.mxu0 %v1323
        %1561 = vmatprep.subr.bf16.mxu0 %v1320
        %1562 = vmatpush2.bf16.msra.mxu0 %v1319
        %1563 = vmatprep.subr.bf16.mxu0 %v1316
        %1564 = vmatpush2.bf16.msra.mxu0 %v1315
        %1565 = vmatprep.subr.bf16.mxu0 %v1312
        %1566 = vmatpush2.bf16.msra.mxu0 %v1311
        %1567 = vmatprep.mubr.bf16.mxu0 %v734
        %1568 = vmatmul.mubr.bf16.gmra.mxu0 %v733
        %v1569 = vpop.f32.mrf.mxu0
        %v1570 = vadd.f32 %v878, %v1569
        %v1571 = vpop.f32.mrf.mxu0
        %v1572 = vadd.f32 %v882, %v1571
        %v1573 = vpop.f32.mrf.mxu0
        %v1574 = vadd.f32 %v878, %v1573
        %v1575 = vpop.f32.mrf.mxu0
        %v1576 = vadd.f32 %v882, %v1575
        %1577 = vmatprep.mubr.bf16.mxu0 %v738
        %1578 = vmatmul.mubr.bf16.gmra.mxu0 %v737
        %v1579 = vpop.f32.mrf.mxu0
        %v1580 = vadd.f32 %v878, %v1579
        %v1581 = vpop.f32.mrf.mxu0
        %v1582 = vadd.f32 %v882, %v1581
        %v1583 = vpop.f32.mrf.mxu0
        %v1584 = vadd.f32 %v878, %v1583
        %v1585 = vpop.f32.mrf.mxu0
        %v1586 = vadd.f32 %v882, %v1585
        %1587 = vmatprep.mubr.bf16.mxu0 %v742
        %1588 = vmatmul.mubr.bf16.gmra.mxu0 %v741
        %v1589 = vpop.f32.mrf.mxu0
        %v1590 = vadd.f32 %v878, %v1589
        %v1591 = vpop.f32.mrf.mxu0
        %v1592 = vadd.f32 %v882, %v1591
        %v1593 = vpop.f32.mrf.mxu0
        %v1594 = vpop.f32.mrf.mxu0
        %1595 = vdwg.mxu0
        %1596 = vmatprep.subr.bf16.mxu0 %v1372
        %1597 = vmatpush1.bf16.msra.mxu0 %v1371
        %1598 = vmatprep.subr.bf16.mxu0 %v1368
        %1599 = vmatpush1.bf16.msra.mxu0 %v1367
        %1600 = vmatprep.subr.bf16.mxu0 %v1364
        %1601 = vmatpush1.bf16.msra.mxu0 %v1363
        %1602 = vmatprep.subr.bf16.mxu0 %v1360
        %1603 = vmatpush1.bf16.msra.mxu0 %v1359
        %1604 = vmatprep.subr.bf16.mxu0 %v1356
        %1605 = vmatpush1.bf16.msra.mxu0 %v1355
        %1606 = vmatprep.subr.bf16.mxu0 %v1352
        %1607 = vmatpush1.bf16.msra.mxu0 %v1351
        %1608 = vmatprep.subr.bf16.mxu0 %v1348
        %1609 = vmatpush1.bf16.msra.mxu0 %v1347
        %1610 = vmatprep.subr.bf16.mxu0 %v1344
        %1611 = vmatpush1.bf16.msra.mxu0 %v1343
        %1612 = vmatprep.subr.bf16.mxu0 %v1404
        %1613 = vmatpush2.bf16.msra.mxu0 %v1403
        %1614 = vmatprep.subr.bf16.mxu0 %v1400
        %1615 = vmatpush2.bf16.msra.mxu0 %v1399
        %1616 = vmatprep.subr.bf16.mxu0 %v1396
        %1617 = vmatpush2.bf16.msra.mxu0 %v1395
        %1618 = vmatprep.subr.bf16.mxu0 %v1392
        %1619 = vmatpush2.bf16.msra.mxu0 %v1391
        %1620 = vmatprep.subr.bf16.mxu0 %v1388
        %1621 = vmatpush2.bf16.msra.mxu0 %v1387
        %1622 = vmatprep.subr.bf16.mxu0 %v1384
        %1623 = vmatpush2.bf16.msra.mxu0 %v1383
        %1624 = vmatprep.subr.bf16.mxu0 %v1380
        %1625 = vmatpush2.bf16.msra.mxu0 %v1379
        %1626 = vmatprep.subr.bf16.mxu0 %v1376
        %1627 = vmatpush2.bf16.msra.mxu0 %v1375
        %1628 = vmatprep.mubr.bf16.mxu0 %v736
        %1629 = vmatmul.mubr.bf16.gmra.mxu0 %v735
        %v1630 = vpop.f32.mrf.mxu0
        %v1631 = vadd.f32 %v1570, %v1630
        %v1632 = vpop.f32.mrf.mxu0
        %v1633 = vadd.f32 %v1572, %v1632
        %v1634 = vpop.f32.mrf.mxu0
        %v1635 = vadd.f32 %v1574, %v1634
        %v1636 = vpop.f32.mrf.mxu0
        %v1637 = vadd.f32 %v1576, %v1636
        %1638 = vmatprep.mubr.bf16.mxu0 %v740
        %1639 = vmatmul.mubr.bf16.gmra.mxu0 %v739
        %v1640 = vpop.f32.mrf.mxu0
        %v1641 = vadd.f32 %v1580, %v1640
        %v1642 = vpop.f32.mrf.mxu0
        %v1643 = vadd.f32 %v1582, %v1642
        %v1644 = vpop.f32.mrf.mxu0
        %v1645 = vadd.f32 %v1584, %v1644
        %v1646 = vpop.f32.mrf.mxu0
        %v1647 = vadd.f32 %v1586, %v1646
        %1648 = vmatprep.mubr.bf16.mxu0 %v744
        %1649 = vmatmul.mubr.bf16.gmra.mxu0 %v743
        %v1650 = vpop.f32.mrf.mxu0
        %v1651 = vadd.f32 %v1590, %v1650
        %v1652 = vpop.f32.mrf.mxu0
        %v1653 = vadd.f32 %v1592, %v1652
        %v1654 = vpop.f32.mrf.mxu0
        %v1655 = vpop.f32.mrf.mxu0
        %1656 = vdwg.mxu0
        %1657 = vmatprep.subr.bf16.mxu0 %v1310
        %1658 = vmatpush1.bf16.msra.mxu0 %v1309
        %1659 = vmatprep.subr.bf16.mxu0 %v1306
        %1660 = vmatpush1.bf16.msra.mxu0 %v1305
        %1661 = vmatprep.subr.bf16.mxu0 %v1302
        %1662 = vmatpush1.bf16.msra.mxu0 %v1301
        %1663 = vmatprep.subr.bf16.mxu0 %v1298
        %1664 = vmatpush1.bf16.msra.mxu0 %v1297
        %1665 = vmatprep.subr.bf16.mxu0 %v1294
        %1666 = vmatpush1.bf16.msra.mxu0 %v1293
        %1667 = vmatprep.subr.bf16.mxu0 %v1290
        %1668 = vmatpush1.bf16.msra.mxu0 %v1289
        %1669 = vmatprep.subr.bf16.mxu0 %v1286
        %1670 = vmatpush1.bf16.msra.mxu0 %v1285
        %1671 = vmatprep.subr.bf16.mxu0 %v1282
        %1672 = vmatpush1.bf16.msra.mxu0 %v1281
        %1673 = vmatprep.subr.bf16.mxu0 %v1342
        %1674 = vmatpush2.bf16.msra.mxu0 %v1341
        %1675 = vmatprep.subr.bf16.mxu0 %v1338
        %1676 = vmatpush2.bf16.msra.mxu0 %v1337
        %1677 = vmatprep.subr.bf16.mxu0 %v1334
        %1678 = vmatpush2.bf16.msra.mxu0 %v1333
        %1679 = vmatprep.subr.bf16.mxu0 %v1330
        %1680 = vmatpush2.bf16.msra.mxu0 %v1329
        %1681 = vmatprep.subr.bf16.mxu0 %v1326
        %1682 = vmatpush2.bf16.msra.mxu0 %v1325
        %1683 = vmatprep.subr.bf16.mxu0 %v1322
        %1684 = vmatpush2.bf16.msra.mxu0 %v1321
        %1685 = vmatprep.subr.bf16.mxu0 %v1318
        %1686 = vmatpush2.bf16.msra.mxu0 %v1317
        %1687 = vmatprep.subr.bf16.mxu0 %v1314
        %1688 = vmatpush2.bf16.msra.mxu0 %v1313
        %1689 = vmatprep.mubr.bf16.mxu0 %v734
        %1690 = vmatmul.mubr.bf16.gmra.mxu0 %v733
        %v1691 = vpop.f32.mrf.mxu0
        %v1692 = vadd.f32 %v886, %v1691
        %v1693 = vpop.f32.mrf.mxu0
        %v1694 = vadd.f32 %v890, %v1693
        %v1695 = vpop.f32.mrf.mxu0
        %v1696 = vadd.f32 %v886, %v1695
        %v1697 = vpop.f32.mrf.mxu0
        %v1698 = vadd.f32 %v890, %v1697
        %1699 = vmatprep.mubr.bf16.mxu0 %v738
        %1700 = vmatmul.mubr.bf16.gmra.mxu0 %v737
        %v1701 = vpop.f32.mrf.mxu0
        %v1702 = vadd.f32 %v886, %v1701
        %v1703 = vpop.f32.mrf.mxu0
        %v1704 = vadd.f32 %v890, %v1703
        %v1705 = vpop.f32.mrf.mxu0
        %v1706 = vadd.f32 %v886, %v1705
        %v1707 = vpop.f32.mrf.mxu0
        %v1708 = vadd.f32 %v890, %v1707
        %1709 = vmatprep.mubr.bf16.mxu0 %v742
        %1710 = vmatmul.mubr.bf16.gmra.mxu0 %v741
        %v1711 = vpop.f32.mrf.mxu0
        %v1712 = vadd.f32 %v886, %v1711
        %v1713 = vpop.f32.mrf.mxu0
        %v1714 = vadd.f32 %v890, %v1713
        %v1715 = vpop.f32.mrf.mxu0
        %v1716 = vpop.f32.mrf.mxu0
        %1717 = vdwg.mxu0
        %1718 = vmatprep.subr.bf16.mxu0 %v1374
        %1719 = vmatpush1.bf16.msra.mxu0 %v1373
        %1720 = vmatprep.subr.bf16.mxu0 %v1370
        %1721 = vmatpush1.bf16.msra.mxu0 %v1369
        %1722 = vmatprep.subr.bf16.mxu0 %v1366
        %1723 = vmatpush1.bf16.msra.mxu0 %v1365
        %1724 = vmatprep.subr.bf16.mxu0 %v1362
        %1725 = vmatpush1.bf16.msra.mxu0 %v1361
        %1726 = vmatprep.subr.bf16.mxu0 %v1358
        %1727 = vmatpush1.bf16.msra.mxu0 %v1357
        %1728 = vmatprep.subr.bf16.mxu0 %v1354
        %1729 = vmatpush1.bf16.msra.mxu0 %v1353
        %1730 = vmatprep.subr.bf16.mxu0 %v1350
        %1731 = vmatpush1.bf16.msra.mxu0 %v1349
        %1732 = vmatprep.subr.bf16.mxu0 %v1346
        %1733 = vmatpush1.bf16.msra.mxu0 %v1345
        %1734 = vmatprep.subr.bf16.mxu0 %v1406
        %1735 = vmatpush2.bf16.msra.mxu0 %v1405
        %1736 = vmatprep.subr.bf16.mxu0 %v1402
        %1737 = vmatpush2.bf16.msra.mxu0 %v1401
        %1738 = vmatprep.subr.bf16.mxu0 %v1398
        %1739 = vmatpush2.bf16.msra.mxu0 %v1397
        %1740 = vmatprep.subr.bf16.mxu0 %v1394
        %1741 = vmatpush2.bf16.msra.mxu0 %v1393
        %1742 = vmatprep.subr.bf16.mxu0 %v1390
        %1743 = vmatpush2.bf16.msra.mxu0 %v1389
        %1744 = vmatprep.subr.bf16.mxu0 %v1386
        %1745 = vmatpush2.bf16.msra.mxu0 %v1385
        %1746 = vmatprep.subr.bf16.mxu0 %v1382
        %1747 = vmatpush2.bf16.msra.mxu0 %v1381
        %1748 = vmatprep.subr.bf16.mxu0 %v1378
        %1749 = vmatpush2.bf16.msra.mxu0 %v1377
        %1750 = vmatprep.mubr.bf16.mxu0 %v736
        %1751 = vmatmul.mubr.bf16.gmra.mxu0 %v735
        %v1752 = vpop.f32.mrf.mxu0
        %v1753 = vadd.f32 %v1692, %v1752
        %v1754 = vpop.f32.mrf.mxu0
        %v1755 = vadd.f32 %v1694, %v1754
        %v1756 = vpop.f32.mrf.mxu0
        %v1757 = vadd.f32 %v1696, %v1756
        %v1758 = vpop.f32.mrf.mxu0
        %v1759 = vadd.f32 %v1698, %v1758
        %1760 = vmatprep.mubr.bf16.mxu0 %v740
        %1761 = vmatmul.mubr.bf16.gmra.mxu0 %v739
        %v1762 = vpop.f32.mrf.mxu0
        %v1763 = vadd.f32 %v1702, %v1762
        %v1764 = vpop.f32.mrf.mxu0
        %v1765 = vadd.f32 %v1704, %v1764
        %v1766 = vpop.f32.mrf.mxu0
        %v1767 = vadd.f32 %v1706, %v1766
        %v1768 = vpop.f32.mrf.mxu0
        %v1769 = vadd.f32 %v1708, %v1768
        %1770 = vmatprep.mubr.bf16.mxu0 %v744
        %1771 = vmatmul.mubr.bf16.gmra.mxu0 %v743
        %v1772 = vpop.f32.mrf.mxu0
        %v1773 = vadd.f32 %v1712, %v1772
        %v1774 = vpop.f32.mrf.mxu0
        %v1775 = vadd.f32 %v1714, %v1774
        %v1776 = vpop.f32.mrf.mxu0
        %v1777 = vpop.f32.mrf.mxu0
        %1778 = vdwg.mxu0
        %v1779 = vmax.f32 %v1631, 0.0
        %v1780 = vmax.f32 %v1633, 0.0
        %v1781 = vmax.f32 %v1753, 0.0
        %v1782 = vmax.f32 %v1755, 0.0
        %v1783 = vmax.f32 %v1635, 0.0
        %v1784 = vmax.f32 %v1637, 0.0
        %v1785 = vmax.f32 %v1757, 0.0
        %v1786 = vmax.f32 %v1759, 0.0
        %v1787 = vmax.f32 %v1641, 0.0
        %v1788 = vmax.f32 %v1643, 0.0
        %v1789 = vmax.f32 %v1763, 0.0
        %v1790 = vmax.f32 %v1765, 0.0
        %v1791 = vmax.f32 %v1645, 0.0
        %v1792 = vmax.f32 %v1647, 0.0
        %v1793 = vmax.f32 %v1767, 0.0
        %v1794 = vmax.f32 %v1769, 0.0
        %v1795 = vmax.f32 %v1651, 0.0
        %v1796 = vmax.f32 %v1653, 0.0
        %v1797 = vmax.f32 %v1773, 0.0
        %v1798 = vmax.f32 %v1775, 0.0
        %v1799 = vpack.c.bf16 %v1783, %v1779
        %v1800 = vpack.c.bf16 %v1784, %v1780
        %v1801 = vpack.c.bf16 %v1785, %v1781
        %v1802 = vpack.c.bf16 %v1786, %v1782
        %v1803 = vpack.c.bf16 %v1791, %v1787
        %v1804 = vpack.c.bf16 %v1792, %v1788
        %v1805 = vpack.c.bf16 %v1793, %v1789
        %v1806 = vpack.c.bf16 %v1794, %v1790
        %v1807 = vpack.c.bf16 %v1795, %v1795
        %v1808 = vpack.c.bf16 %v1796, %v1796
        %v1809 = vpack.c.bf16 %v1797, %v1797
        %v1810 = vpack.c.bf16 %v1798, %v1798
        %v1811 = vld [vmem:[#allocation10] sm:$0xff]
        %v1812 = vld [vmem:[#allocation10 + $0x8] sm:$0xf]
        %v1813 = vld [vmem:[#allocation10 + $0xc] sm:$0xff]
        %v1814 = vld [vmem:[#allocation10 + $0x14] sm:$0xf]
        %v1815 = vld [vmem:[#allocation10 + $0x18] sm:$0xff]
        %v1816 = vld [vmem:[#allocation10 + $0x20] sm:$0xf]
        %v1817 = vld [vmem:[#allocation10 + $0x24] sm:$0xff]
        %v1818 = vld [vmem:[#allocation10 + $0x2c] sm:$0xf]
        %v1819 = vld [vmem:[#allocation10 + $0x30] sm:$0xff]
        %v1820 = vld [vmem:[#allocation10 + $0x38] sm:$0xf]
        %v1821 = vld [vmem:[#allocation10 + $0x3c] sm:$0xff]
        %v1822 = vld [vmem:[#allocation10 + $0x44] sm:$0xf]
        %v1823 = vld [vmem:[#allocation10 + $0x48] sm:$0xff]
        %v1824 = vld [vmem:[#allocation10 + $0x50] sm:$0xf]
        %v1825 = vld [vmem:[#allocation10 + $0x54] sm:$0xff]
        %v1826 = vld [vmem:[#allocation10 + $0x5c] sm:$0xf]
        %v1827 = vld [vmem:[#allocation10 + $0x60] sm:$0xff]
        %v1828 = vld [vmem:[#allocation10 + $0x68] sm:$0xf]
        %v1829 = vld [vmem:[#allocation10 + $0x6c] sm:$0xff]
        %v1830 = vld [vmem:[#allocation10 + $0x74] sm:$0xf]
        %v1831 = vld [vmem:[#allocation10 + $0x78] sm:$0xff]
        %v1832 = vld [vmem:[#allocation10 + $0x80] sm:$0xf]
        %v1833 = vld [vmem:[#allocation10 + $0x84] sm:$0xff]
        %v1834 = vld [vmem:[#allocation10 + $0x8c] sm:$0xf]
        %v1835 = vld [vmem:[#allocation10 + $0x90] sm:$0xff]
        %v1836 = vld [vmem:[#allocation10 + $0x98] sm:$0xf]
        %v1837 = vld [vmem:[#allocation10 + $0x9c] sm:$0xff]
        %v1838 = vld [vmem:[#allocation10 + $0xa4] sm:$0xf]
        %v1839 = vld [vmem:[#allocation10 + $0xa8] sm:$0xff]
        %v1840 = vld [vmem:[#allocation10 + $0xb0] sm:$0xf]
        %v1841 = vld [vmem:[#allocation10 + $0xb4] sm:$0xff]
        %v1842 = vld [vmem:[#allocation10 + $0xbc] sm:$0xf]
        %v1843 = vld [vmem:[#allocation10 + $0xc0] sm:$0xff]
        %v1844 = vld [vmem:[#allocation10 + $0xc8] sm:$0xf]
        %v1845 = vld [vmem:[#allocation10 + $0xcc] sm:$0xff]
        %v1846 = vld [vmem:[#allocation10 + $0xd4] sm:$0xf]
        %v1847 = vld [vmem:[#allocation10 + $0xd8] sm:$0xff]
        %v1848 = vld [vmem:[#allocation10 + $0xe0] sm:$0xf]
        %v1849 = vld [vmem:[#allocation10 + $0xe4] sm:$0xff]
        %v1850 = vld [vmem:[#allocation10 + $0xec] sm:$0xf]
        %v1851 = vld [vmem:[#allocation10 + $0xf0] sm:$0xff]
        %v1852 = vld [vmem:[#allocation10 + $0xf8] sm:$0xf]
        %v1853 = vld [vmem:[#allocation10 + $0xfc] sm:$0xff]
        %v1854 = vld [vmem:[#allocation10 + $0x104] sm:$0xf]
        %v1855 = vld [vmem:[#allocation10 + $0x108] sm:$0xff]
        %v1856 = vld [vmem:[#allocation10 + $0x110] sm:$0xf]
        %v1857 = vld [vmem:[#allocation10 + $0x114] sm:$0xff]
        %v1858 = vld [vmem:[#allocation10 + $0x11c] sm:$0xf]
        %v1859 = vld [vmem:[#allocation10 + $0x120] sm:$0xff]
        %v1860 = vld [vmem:[#allocation10 + $0x128] sm:$0xf]
        %v1861 = vld [vmem:[#allocation10 + $0x12c] sm:$0xff]
        %v1862 = vld [vmem:[#allocation10 + $0x134] sm:$0xf]
        %v1863 = vld [vmem:[#allocation10 + $0x138] sm:$0xff]
        %v1864 = vld [vmem:[#allocation10 + $0x140] sm:$0xf]
        %v1865 = vld [vmem:[#allocation10 + $0x144] sm:$0xff]
        %v1866 = vld [vmem:[#allocation10 + $0x14c] sm:$0xf]
        %v1867 = vld [vmem:[#allocation10 + $0x150] sm:$0xff]
        %v1868 = vld [vmem:[#allocation10 + $0x158] sm:$0xf]
        %v1869 = vld [vmem:[#allocation10 + $0x15c] sm:$0xff]
        %v1870 = vld [vmem:[#allocation10 + $0x164] sm:$0xf]
        %v1871 = vld [vmem:[#allocation10 + $0x168] sm:$0xff]
        %v1872 = vld [vmem:[#allocation10 + $0x170] sm:$0xf]
        %v1873 = vld [vmem:[#allocation10 + $0x174] sm:$0xff]
        %v1874 = vld [vmem:[#allocation10 + $0x17c] sm:$0xf]
        %v1875 = vld [vmem:[#allocation10 + $0x180] sm:$0xff]
        %v1876 = vld [vmem:[#allocation10 + $0x188] sm:$0xf]
        %v1877 = vld [vmem:[#allocation10 + $0x18c] sm:$0xff]
        %v1878 = vld [vmem:[#allocation10 + $0x194] sm:$0xf]
        %v1879 = vld [vmem:[#allocation10 + $0x198] sm:$0xff]
        %v1880 = vld [vmem:[#allocation10 + $0x1a0] sm:$0xf]
        %v1881 = vld [vmem:[#allocation10 + $0x1a4] sm:$0xff]
        %v1882 = vld [vmem:[#allocation10 + $0x1ac] sm:$0xf]
        %v1883 = vld [vmem:[#allocation10 + $0x1b0] sm:$0xff]
        %v1884 = vld [vmem:[#allocation10 + $0x1b8] sm:$0xf]
        %v1885 = vld [vmem:[#allocation10 + $0x1bc] sm:$0xff]
        %v1886 = vld [vmem:[#allocation10 + $0x1c4] sm:$0xf]
        %v1887 = vld [vmem:[#allocation10 + $0x1c8] sm:$0xff]
        %v1888 = vld [vmem:[#allocation10 + $0x1d0] sm:$0xf]
        %v1889 = vld [vmem:[#allocation10 + $0x1d4] sm:$0xff]
        %v1890 = vld [vmem:[#allocation10 + $0x1dc] sm:$0xf]
        %v1891 = vld [vmem:[#allocation10 + $0x1e0] sm:$0xff]
        %v1892 = vld [vmem:[#allocation10 + $0x1e8] sm:$0xf]
        %v1893 = vld [vmem:[#allocation10 + $0x1ec] sm:$0xff]
        %v1894 = vld [vmem:[#allocation10 + $0x1f4] sm:$0xf]
        %v1895 = vld [vmem:[#allocation10 + $0x1f8] sm:$0xff]
        %v1896 = vld [vmem:[#allocation10 + $0x200] sm:$0xf]
        %v1897 = vld [vmem:[#allocation10 + $0x204] sm:$0xff]
        %v1898 = vld [vmem:[#allocation10 + $0x20c] sm:$0xf]
        %v1899 = vld [vmem:[#allocation10 + $0x210] sm:$0xff]
        %v1900 = vld [vmem:[#allocation10 + $0x218] sm:$0xf]
        %v1901 = vld [vmem:[#allocation10 + $0x21c] sm:$0xff]
        %v1902 = vld [vmem:[#allocation10 + $0x224] sm:$0xf]
        %v1903 = vld [vmem:[#allocation10 + $0x228] sm:$0xff]
        %v1904 = vld [vmem:[#allocation10 + $0x230] sm:$0xf]
        %v1905 = vld [vmem:[#allocation10 + $0x234] sm:$0xff]
        %v1906 = vld [vmem:[#allocation10 + $0x23c] sm:$0xf]
        %v1907 = vld [vmem:[#allocation10 + $0x240] sm:$0xff]
        %v1908 = vld [vmem:[#allocation10 + $0x248] sm:$0xf]
        %v1909 = vld [vmem:[#allocation10 + $0x24c] sm:$0xff]
        %v1910 = vld [vmem:[#allocation10 + $0x254] sm:$0xf]
        %v1911 = vld [vmem:[#allocation10 + $0x258] sm:$0xff]
        %v1912 = vld [vmem:[#allocation10 + $0x260] sm:$0xf]
        %v1913 = vld [vmem:[#allocation10 + $0x264] sm:$0xff]
        %v1914 = vld [vmem:[#allocation10 + $0x26c] sm:$0xf]
        %v1915 = vld [vmem:[#allocation10 + $0x270] sm:$0xff]
        %v1916 = vld [vmem:[#allocation10 + $0x278] sm:$0xf]
        %v1917 = vld [vmem:[#allocation10 + $0x27c] sm:$0xff]
        %v1918 = vld [vmem:[#allocation10 + $0x284] sm:$0xf]
        %v1919 = vld [vmem:[#allocation10 + $0x288] sm:$0xff]
        %v1920 = vld [vmem:[#allocation10 + $0x290] sm:$0xf]
        %v1921 = vld [vmem:[#allocation10 + $0x294] sm:$0xff]
        %v1922 = vld [vmem:[#allocation10 + $0x29c] sm:$0xf]
        %v1923 = vld [vmem:[#allocation10 + $0x2a0] sm:$0xff]
        %v1924 = vld [vmem:[#allocation10 + $0x2a8] sm:$0xf]
        %v1925 = vld [vmem:[#allocation10 + $0x2ac] sm:$0xff]
        %v1926 = vld [vmem:[#allocation10 + $0x2b4] sm:$0xf]
        %v1927 = vld [vmem:[#allocation10 + $0x2b8] sm:$0xff]
        %v1928 = vld [vmem:[#allocation10 + $0x2c0] sm:$0xf]
        %v1929 = vld [vmem:[#allocation10 + $0x2c4] sm:$0xff]
        %v1930 = vld [vmem:[#allocation10 + $0x2cc] sm:$0xf]
        %v1931 = vld [vmem:[#allocation10 + $0x2d0] sm:$0xff]
        %v1932 = vld [vmem:[#allocation10 + $0x2d8] sm:$0xf]
        %v1933 = vld [vmem:[#allocation10 + $0x2dc] sm:$0xff]
        %v1934 = vld [vmem:[#allocation10 + $0x2e4] sm:$0xf]
        %v1935 = vld [vmem:[#allocation10 + $0x2e8] sm:$0xff]
        %v1936 = vld [vmem:[#allocation10 + $0x2f0] sm:$0xf]
        %v1937 = vld [vmem:[#allocation10 + $0x2f4] sm:$0xff]
        %v1938 = vld [vmem:[#allocation10 + $0x2fc] sm:$0xf]
        %v1939 = vld [vmem:[%s6] sm:$0x7]
        %v1941 = vlaneseq
        %v1942 = vshrl.u32 %v1941, 7
        %v1943 = vsub.s32 0, %v1942
        %v1944 = vrot.slane %v1939, %v1943
        %v1945 = vlaneseq
        %v1946 = vshrl.u32 %v1945, 7
        %v1947 = vsub.s32 1, %v1946
        %v1948 = vrot.slane %v1939, %v1947
        %v1949 = vlaneseq
        %v1950 = vshrl.u32 %v1949, 7
        %v1951 = vsub.s32 2, %v1950
        %v1952 = vrot.slane %v1939, %v1951
        %v2084 = vunpack.c.l.b16 %v1811
        %v2085 = vunpack.c.h.b16 %v1811
        %v2086 = vunpack.c.l.b16 %v1812
        %v2087 = vunpack.c.l.b16 %v1813
        %v2088 = vunpack.c.h.b16 %v1813
        %v2089 = vunpack.c.l.b16 %v1814
        %v2090 = vunpack.c.l.b16 %v1815
        %v2091 = vunpack.c.h.b16 %v1815
        %v2092 = vunpack.c.l.b16 %v1816
        %v2093 = vunpack.c.l.b16 %v1817
        %v2094 = vunpack.c.h.b16 %v1817
        %v2095 = vunpack.c.l.b16 %v1818
        %v2096 = vunpack.c.l.b16 %v1819
        %v2097 = vunpack.c.h.b16 %v1819
        %v2098 = vunpack.c.l.b16 %v1820
        %v2099 = vunpack.c.l.b16 %v1821
        %v2100 = vunpack.c.h.b16 %v1821
        %v2101 = vunpack.c.l.b16 %v1822
        %v2102 = vunpack.c.l.b16 %v1823
        %v2103 = vunpack.c.h.b16 %v1823
        %v2104 = vunpack.c.l.b16 %v1824
        %v2105 = vunpack.c.l.b16 %v1825
        %v2106 = vunpack.c.h.b16 %v1825
        %v2107 = vunpack.c.l.b16 %v1826
        %v2108 = vunpack.c.l.b16 %v1827
        %v2109 = vunpack.c.h.b16 %v1827
        %v2110 = vunpack.c.l.b16 %v1828
        %v2111 = vunpack.c.l.b16 %v1829
        %v2112 = vunpack.c.h.b16 %v1829
        %v2113 = vunpack.c.l.b16 %v1830
        %v2114 = vunpack.c.l.b16 %v1831
        %v2115 = vunpack.c.h.b16 %v1831
        %v2116 = vunpack.c.l.b16 %v1832
        %v2117 = vunpack.c.l.b16 %v1833
        %v2118 = vunpack.c.h.b16 %v1833
        %v2119 = vunpack.c.l.b16 %v1834
        %v2120 = vunpack.c.l.b16 %v1835
        %v2121 = vunpack.c.h.b16 %v1835
        %v2122 = vunpack.c.l.b16 %v1836
        %v2123 = vunpack.c.l.b16 %v1837
        %v2124 = vunpack.c.h.b16 %v1837
        %v2125 = vunpack.c.l.b16 %v1838
        %v2126 = vunpack.c.l.b16 %v1839
        %v2127 = vunpack.c.h.b16 %v1839
        %v2128 = vunpack.c.l.b16 %v1840
        %v2129 = vunpack.c.l.b16 %v1841
        %v2130 = vunpack.c.h.b16 %v1841
        %v2131 = vunpack.c.l.b16 %v1842
        %v2132 = vunpack.c.l.b16 %v1843
        %v2133 = vunpack.c.h.b16 %v1843
        %v2134 = vunpack.c.l.b16 %v1844
        %v2135 = vunpack.c.l.b16 %v1845
        %v2136 = vunpack.c.h.b16 %v1845
        %v2137 = vunpack.c.l.b16 %v1846
        %v2138 = vunpack.c.l.b16 %v1847
        %v2139 = vunpack.c.h.b16 %v1847
        %v2140 = vunpack.c.l.b16 %v1848
        %v2141 = vunpack.c.l.b16 %v1849
        %v2142 = vunpack.c.h.b16 %v1849
        %v2143 = vunpack.c.l.b16 %v1850
        %v2144 = vunpack.c.l.b16 %v1851
        %v2145 = vunpack.c.h.b16 %v1851
        %v2146 = vunpack.c.l.b16 %v1852
        %v2147 = vunpack.c.l.b16 %v1853
        %v2148 = vunpack.c.h.b16 %v1853
        %v2149 = vunpack.c.l.b16 %v1854
        %v2150 = vunpack.c.l.b16 %v1855
        %v2151 = vunpack.c.h.b16 %v1855
        %v2152 = vunpack.c.l.b16 %v1856
        %v2153 = vunpack.c.l.b16 %v1857
        %v2154 = vunpack.c.h.b16 %v1857
        %v2155 = vunpack.c.l.b16 %v1858
        %v2156 = vunpack.c.l.b16 %v1859
        %v2157 = vunpack.c.h.b16 %v1859
        %v2158 = vunpack.c.l.b16 %v1860
        %v2159 = vunpack.c.l.b16 %v1861
        %v2160 = vunpack.c.h.b16 %v1861
        %v2161 = vunpack.c.l.b16 %v1862
        %v2162 = vunpack.c.l.b16 %v1863
        %v2163 = vunpack.c.h.b16 %v1863
        %v2164 = vunpack.c.l.b16 %v1864
        %v2165 = vunpack.c.l.b16 %v1865
        %v2166 = vunpack.c.h.b16 %v1865
        %v2167 = vunpack.c.l.b16 %v1866
        %v2168 = vunpack.c.l.b16 %v1867
        %v2169 = vunpack.c.h.b16 %v1867
        %v2170 = vunpack.c.l.b16 %v1868
        %v2171 = vunpack.c.l.b16 %v1869
        %v2172 = vunpack.c.h.b16 %v1869
        %v2173 = vunpack.c.l.b16 %v1870
        %v2174 = vunpack.c.l.b16 %v1871
        %v2175 = vunpack.c.h.b16 %v1871
        %v2176 = vunpack.c.l.b16 %v1872
        %v2177 = vunpack.c.l.b16 %v1873
        %v2178 = vunpack.c.h.b16 %v1873
        %v2179 = vunpack.c.l.b16 %v1874
        %v2180 = vunpack.c.l.b16 %v1875
        %v2181 = vunpack.c.h.b16 %v1875
        %v2182 = vunpack.c.l.b16 %v1876
        %v2183 = vunpack.c.l.b16 %v1877
        %v2184 = vunpack.c.h.b16 %v1877
        %v2185 = vunpack.c.l.b16 %v1878
        %v2186 = vunpack.c.l.b16 %v1879
        %v2187 = vunpack.c.h.b16 %v1879
        %v2188 = vunpack.c.l.b16 %v1880
        %v2189 = vunpack.c.l.b16 %v1881
        %v2190 = vunpack.c.h.b16 %v1881
        %v2191 = vunpack.c.l.b16 %v1882
        %v2192 = vunpack.c.l.b16 %v1883
        %v2193 = vunpack.c.h.b16 %v1883
        %v2194 = vunpack.c.l.b16 %v1884
        %v2195 = vunpack.c.l.b16 %v1885
        %v2196 = vunpack.c.h.b16 %v1885
        %v2197 = vunpack.c.l.b16 %v1886
        %v2198 = vunpack.c.l.b16 %v1887
        %v2199 = vunpack.c.h.b16 %v1887
        %v2200 = vunpack.c.l.b16 %v1888
        %v2201 = vunpack.c.l.b16 %v1889
        %v2202 = vunpack.c.h.b16 %v1889
        %v2203 = vunpack.c.l.b16 %v1890
        %v2204 = vunpack.c.l.b16 %v1891
        %v2205 = vunpack.c.h.b16 %v1891
        %v2206 = vunpack.c.l.b16 %v1892
        %v2207 = vunpack.c.l.b16 %v1893
        %v2208 = vunpack.c.h.b16 %v1893
        %v2209 = vunpack.c.l.b16 %v1894
        %v2210 = vunpack.c.l.b16 %v1895
        %v2211 = vunpack.c.h.b16 %v1895
        %v2212 = vunpack.c.l.b16 %v1896
        %v2213 = vunpack.c.l.b16 %v1897
        %v2214 = vunpack.c.h.b16 %v1897
        %v2215 = vunpack.c.l.b16 %v1898
        %v2216 = vunpack.c.l.b16 %v1899
        %v2217 = vunpack.c.h.b16 %v1899
        %v2218 = vunpack.c.l.b16 %v1900
        %v2219 = vunpack.c.l.b16 %v1901
        %v2220 = vunpack.c.h.b16 %v1901
        %v2221 = vunpack.c.l.b16 %v1902
        %v2222 = vunpack.c.l.b16 %v1903
        %v2223 = vunpack.c.h.b16 %v1903
        %v2224 = vunpack.c.l.b16 %v1904
        %v2225 = vunpack.c.l.b16 %v1905
        %v2226 = vunpack.c.h.b16 %v1905
        %v2227 = vunpack.c.l.b16 %v1906
        %v2228 = vunpack.c.l.b16 %v1907
        %v2229 = vunpack.c.h.b16 %v1907
        %v2230 = vunpack.c.l.b16 %v1908
        %v2231 = vunpack.c.l.b16 %v1909
        %v2232 = vunpack.c.h.b16 %v1909
        %v2233 = vunpack.c.l.b16 %v1910
        %v2234 = vunpack.c.l.b16 %v1911
        %v2235 = vunpack.c.h.b16 %v1911
        %v2236 = vunpack.c.l.b16 %v1912
        %v2237 = vunpack.c.l.b16 %v1913
        %v2238 = vunpack.c.h.b16 %v1913
        %v2239 = vunpack.c.l.b16 %v1914
        %v2240 = vunpack.c.l.b16 %v1915
        %v2241 = vunpack.c.h.b16 %v1915
        %v2242 = vunpack.c.l.b16 %v1916
        %v2243 = vunpack.c.l.b16 %v1917
        %v2244 = vunpack.c.h.b16 %v1917
        %v2245 = vunpack.c.l.b16 %v1918
        %v2246 = vunpack.c.l.b16 %v1919
        %v2247 = vunpack.c.h.b16 %v1919
        %v2248 = vunpack.c.l.b16 %v1920
        %v2249 = vunpack.c.l.b16 %v1921
        %v2250 = vunpack.c.h.b16 %v1921
        %v2251 = vunpack.c.l.b16 %v1922
        %v2252 = vunpack.c.l.b16 %v1923
        %v2253 = vunpack.c.h.b16 %v1923
        %v2254 = vunpack.c.l.b16 %v1924
        %v2255 = vunpack.c.l.b16 %v1925
        %v2256 = vunpack.c.h.b16 %v1925
        %v2257 = vunpack.c.l.b16 %v1926
        %v2258 = vunpack.c.l.b16 %v1927
        %v2259 = vunpack.c.h.b16 %v1927
        %v2260 = vunpack.c.l.b16 %v1928
        %v2261 = vunpack.c.l.b16 %v1929
        %v2262 = vunpack.c.h.b16 %v1929
        %v2263 = vunpack.c.l.b16 %v1930
        %v2264 = vunpack.c.l.b16 %v1931
        %v2265 = vunpack.c.h.b16 %v1931
        %v2266 = vunpack.c.l.b16 %v1932
        %v2267 = vunpack.c.l.b16 %v1933
        %v2268 = vunpack.c.h.b16 %v1933
        %v2269 = vunpack.c.l.b16 %v1934
        %v2270 = vunpack.c.l.b16 %v1935
        %v2271 = vunpack.c.h.b16 %v1935
        %v2272 = vunpack.c.l.b16 %v1936
        %v2273 = vunpack.c.l.b16 %v1937
        %v2274 = vunpack.c.h.b16 %v1937
        %v2275 = vunpack.c.l.b16 %v1938
        %v2276 = vpack.c.b16 %v2087, %v2084
        %v2277 = vpack.c.b16 %v2088, %v2085
        %v2278 = vpack.c.b16 %v2089, %v2086
        %v2279 = vpack.c.b16 %v2093, %v2090
        %v2280 = vpack.c.b16 %v2094, %v2091
        %v2281 = vpack.c.b16 %v2095, %v2092
        %v2282 = vpack.c.b16 %v2099, %v2096
        %v2283 = vpack.c.b16 %v2100, %v2097
        %v2284 = vpack.c.b16 %v2101, %v2098
        %v2285 = vpack.c.b16 %v2105, %v2102
        %v2286 = vpack.c.b16 %v2106, %v2103
        %v2287 = vpack.c.b16 %v2107, %v2104
        %v2288 = vpack.c.b16 %v2111, %v2108
        %v2289 = vpack.c.b16 %v2112, %v2109
        %v2290 = vpack.c.b16 %v2113, %v2110
        %v2291 = vpack.c.b16 %v2117, %v2114
        %v2292 = vpack.c.b16 %v2118, %v2115
        %v2293 = vpack.c.b16 %v2119, %v2116
        %v2294 = vpack.c.b16 %v2123, %v2120
        %v2295 = vpack.c.b16 %v2124, %v2121
        %v2296 = vpack.c.b16 %v2125, %v2122
        %v2297 = vpack.c.b16 %v2129, %v2126
        %v2298 = vpack.c.b16 %v2130, %v2127
        %v2299 = vpack.c.b16 %v2131, %v2128
        %v2300 = vpack.c.b16 %v2135, %v2132
        %v2301 = vpack.c.b16 %v2136, %v2133
        %v2302 = vpack.c.b16 %v2137, %v2134
        %v2303 = vpack.c.b16 %v2141, %v2138
        %v2304 = vpack.c.b16 %v2142, %v2139
        %v2305 = vpack.c.b16 %v2143, %v2140
        %v2306 = vpack.c.b16 %v2147, %v2144
        %v2307 = vpack.c.b16 %v2148, %v2145
        %v2308 = vpack.c.b16 %v2149, %v2146
        %v2309 = vpack.c.b16 %v2153, %v2150
        %v2310 = vpack.c.b16 %v2154, %v2151
        %v2311 = vpack.c.b16 %v2155, %v2152
        %v2312 = vpack.c.b16 %v2159, %v2156
        %v2313 = vpack.c.b16 %v2160, %v2157
        %v2314 = vpack.c.b16 %v2161, %v2158
        %v2315 = vpack.c.b16 %v2165, %v2162
        %v2316 = vpack.c.b16 %v2166, %v2163
        %v2317 = vpack.c.b16 %v2167, %v2164
        %v2318 = vpack.c.b16 %v2171, %v2168
        %v2319 = vpack.c.b16 %v2172, %v2169
        %v2320 = vpack.c.b16 %v2173, %v2170
        %v2321 = vpack.c.b16 %v2177, %v2174
        %v2322 = vpack.c.b16 %v2178, %v2175
        %v2323 = vpack.c.b16 %v2179, %v2176
        %v2324 = vpack.c.b16 %v2183, %v2180
        %v2325 = vpack.c.b16 %v2184, %v2181
        %v2326 = vpack.c.b16 %v2185, %v2182
        %v2327 = vpack.c.b16 %v2189, %v2186
        %v2328 = vpack.c.b16 %v2190, %v2187
        %v2329 = vpack.c.b16 %v2191, %v2188
        %v2330 = vpack.c.b16 %v2195, %v2192
        %v2331 = vpack.c.b16 %v2196, %v2193
        %v2332 = vpack.c.b16 %v2197, %v2194
        %v2333 = vpack.c.b16 %v2201, %v2198
        %v2334 = vpack.c.b16 %v2202, %v2199
        %v2335 = vpack.c.b16 %v2203, %v2200
        %v2336 = vpack.c.b16 %v2207, %v2204
        %v2337 = vpack.c.b16 %v2208, %v2205
        %v2338 = vpack.c.b16 %v2209, %v2206
        %v2339 = vpack.c.b16 %v2213, %v2210
        %v2340 = vpack.c.b16 %v2214, %v2211
        %v2341 = vpack.c.b16 %v2215, %v2212
        %v2342 = vpack.c.b16 %v2219, %v2216
        %v2343 = vpack.c.b16 %v2220, %v2217
        %v2344 = vpack.c.b16 %v2221, %v2218
        %v2345 = vpack.c.b16 %v2225, %v2222
        %v2346 = vpack.c.b16 %v2226, %v2223
        %v2347 = vpack.c.b16 %v2227, %v2224
        %v2348 = vpack.c.b16 %v2231, %v2228
        %v2349 = vpack.c.b16 %v2232, %v2229
        %v2350 = vpack.c.b16 %v2233, %v2230
        %v2351 = vpack.c.b16 %v2237, %v2234
        %v2352 = vpack.c.b16 %v2238, %v2235
        %v2353 = vpack.c.b16 %v2239, %v2236
        %v2354 = vpack.c.b16 %v2243, %v2240
        %v2355 = vpack.c.b16 %v2244, %v2241
        %v2356 = vpack.c.b16 %v2245, %v2242
        %v2357 = vpack.c.b16 %v2249, %v2246
        %v2358 = vpack.c.b16 %v2250, %v2247
        %v2359 = vpack.c.b16 %v2251, %v2248
        %v2360 = vpack.c.b16 %v2255, %v2252
        %v2361 = vpack.c.b16 %v2256, %v2253
        %v2362 = vpack.c.b16 %v2257, %v2254
        %v2363 = vpack.c.b16 %v2261, %v2258
        %v2364 = vpack.c.b16 %v2262, %v2259
        %v2365 = vpack.c.b16 %v2263, %v2260
        %v2366 = vpack.c.b16 %v2267, %v2264
        %v2367 = vpack.c.b16 %v2268, %v2265
        %v2368 = vpack.c.b16 %v2269, %v2266
        %v2369 = vpack.c.b16 %v2273, %v2270
        %v2370 = vpack.c.b16 %v2274, %v2271
        %v2371 = vpack.c.b16 %v2275, %v2272
        %2468 = vmatprep.subr.bf16.mxu0 %v2298
        %2469 = vmatpush1.bf16.msra.mxu0 %v2297
        %2470 = vmatprep.subr.bf16.mxu0 %v2295
        %2471 = vmatpush1.bf16.msra.mxu0 %v2294
        %2472 = vmatprep.subr.bf16.mxu0 %v2292
        %2473 = vmatpush1.bf16.msra.mxu0 %v2291
        %2474 = vmatprep.subr.bf16.mxu0 %v2289
        %2475 = vmatpush1.bf16.msra.mxu0 %v2288
        %2476 = vmatprep.subr.bf16.mxu0 %v2286
        %2477 = vmatpush1.bf16.msra.mxu0 %v2285
        %2478 = vmatprep.subr.bf16.mxu0 %v2283
        %2479 = vmatpush1.bf16.msra.mxu0 %v2282
        %2480 = vmatprep.subr.bf16.mxu0 %v2280
        %2481 = vmatpush1.bf16.msra.mxu0 %v2279
        %2482 = vmatprep.subr.bf16.mxu0 %v2277
        %2483 = vmatpush1.bf16.msra.mxu0 %v2276
        %2484 = vmatprep.subr.bf16.mxu0 %v2322
        %2485 = vmatpush2.bf16.msra.mxu0 %v2321
        %2486 = vmatprep.subr.bf16.mxu0 %v2319
        %2487 = vmatpush2.bf16.msra.mxu0 %v2318
        %2488 = vmatprep.subr.bf16.mxu0 %v2316
        %2489 = vmatpush2.bf16.msra.mxu0 %v2315
        %2490 = vmatprep.subr.bf16.mxu0 %v2313
        %2491 = vmatpush2.bf16.msra.mxu0 %v2312
        %2492 = vmatprep.subr.bf16.mxu0 %v2310
        %2493 = vmatpush2.bf16.msra.mxu0 %v2309
        %2494 = vmatprep.subr.bf16.mxu0 %v2307
        %2495 = vmatpush2.bf16.msra.mxu0 %v2306
        %2496 = vmatprep.subr.bf16.mxu0 %v2304
        %2497 = vmatpush2.bf16.msra.mxu0 %v2303
        %2498 = vmatprep.subr.bf16.mxu0 %v2301
        %2499 = vmatpush2.bf16.msra.mxu0 %v2300
        %2500 = vmatprep.mubr.bf16.mxu0 %v1800
        %2501 = vmatmul.mubr.bf16.gmra.mxu0 %v1799
        %v2502 = vpop.f32.mrf.mxu0
        %v2503 = vadd.f32 %v1944, %v2502
        %v2504 = vpop.f32.mrf.mxu0
        %v2505 = vadd.f32 %v1948, %v2504
        %v2506 = vpop.f32.mrf.mxu0
        %v2507 = vadd.f32 %v1944, %v2506
        %v2508 = vpop.f32.mrf.mxu0
        %v2509 = vadd.f32 %v1948, %v2508
        %2510 = vmatprep.mubr.bf16.mxu0 %v1804
        %2511 = vmatmul.mubr.bf16.gmra.mxu0 %v1803
        %v2512 = vpop.f32.mrf.mxu0
        %v2513 = vadd.f32 %v1944, %v2512
        %v2514 = vpop.f32.mrf.mxu0
        %v2515 = vadd.f32 %v1948, %v2514
        %v2516 = vpop.f32.mrf.mxu0
        %v2517 = vadd.f32 %v1944, %v2516
        %v2518 = vpop.f32.mrf.mxu0
        %v2519 = vadd.f32 %v1948, %v2518
        %2520 = vmatprep.mubr.bf16.mxu0 %v1808
        %2521 = vmatmul.mubr.bf16.gmra.mxu0 %v1807
        %v2522 = vpop.f32.mrf.mxu0
        %v2523 = vadd.f32 %v1944, %v2522
        %v2524 = vpop.f32.mrf.mxu0
        %v2525 = vadd.f32 %v1948, %v2524
        %v2526 = vpop.f32.mrf.mxu0
        %v2527 = vpop.f32.mrf.mxu0
        %2528 = vdwg.mxu0
        %2529 = vmatprep.subr.bf16.mxu0 %v2346
        %2530 = vmatpush1.bf16.msra.mxu0 %v2345
        %2531 = vmatprep.subr.bf16.mxu0 %v2343
        %2532 = vmatpush1.bf16.msra.mxu0 %v2342
        %2533 = vmatprep.subr.bf16.mxu0 %v2340
        %2534 = vmatpush1.bf16.msra.mxu0 %v2339
        %2535 = vmatprep.subr.bf16.mxu0 %v2337
        %2536 = vmatpush1.bf16.msra.mxu0 %v2336
        %2537 = vmatprep.subr.bf16.mxu0 %v2334
        %2538 = vmatpush1.bf16.msra.mxu0 %v2333
        %2539 = vmatprep.subr.bf16.mxu0 %v2331
        %2540 = vmatpush1.bf16.msra.mxu0 %v2330
        %2541 = vmatprep.subr.bf16.mxu0 %v2328
        %2542 = vmatpush1.bf16.msra.mxu0 %v2327
        %2543 = vmatprep.subr.bf16.mxu0 %v2325
        %2544 = vmatpush1.bf16.msra.mxu0 %v2324
        %2545 = vmatprep.subr.bf16.mxu0 %v2370
        %2546 = vmatpush2.bf16.msra.mxu0 %v2369
        %2547 = vmatprep.subr.bf16.mxu0 %v2367
        %2548 = vmatpush2.bf16.msra.mxu0 %v2366
        %2549 = vmatprep.subr.bf16.mxu0 %v2364
        %2550 = vmatpush2.bf16.msra.mxu0 %v2363
        %2551 = vmatprep.subr.bf16.mxu0 %v2361
        %2552 = vmatpush2.bf16.msra.mxu0 %v2360
        %2553 = vmatprep.subr.bf16.mxu0 %v2358
        %2554 = vmatpush2.bf16.msra.mxu0 %v2357
        %2555 = vmatprep.subr.bf16.mxu0 %v2355
        %2556 = vmatpush2.bf16.msra.mxu0 %v2354
        %2557 = vmatprep.subr.bf16.mxu0 %v2352
        %2558 = vmatpush2.bf16.msra.mxu0 %v2351
        %2559 = vmatprep.subr.bf16.mxu0 %v2349
        %2560 = vmatpush2.bf16.msra.mxu0 %v2348
        %2561 = vmatprep.mubr.bf16.mxu0 %v1802
        %2562 = vmatmul.mubr.bf16.gmra.mxu0 %v1801
        %v2563 = vpop.f32.mrf.mxu0
        %v2564 = vadd.f32 %v2503, %v2563
        %v2565 = vpop.f32.mrf.mxu0
        %v2566 = vadd.f32 %v2505, %v2565
        %v2567 = vpop.f32.mrf.mxu0
        %v2568 = vadd.f32 %v2507, %v2567
        %v2569 = vpop.f32.mrf.mxu0
        %v2570 = vadd.f32 %v2509, %v2569
        %2571 = vmatprep.mubr.bf16.mxu0 %v1806
        %2572 = vmatmul.mubr.bf16.gmra.mxu0 %v1805
        %v2573 = vpop.f32.mrf.mxu0
        %v2574 = vadd.f32 %v2513, %v2573
        %v2575 = vpop.f32.mrf.mxu0
        %v2576 = vadd.f32 %v2515, %v2575
        %v2577 = vpop.f32.mrf.mxu0
        %v2578 = vadd.f32 %v2517, %v2577
        %v2579 = vpop.f32.mrf.mxu0
        %v2580 = vadd.f32 %v2519, %v2579
        %2581 = vmatprep.mubr.bf16.mxu0 %v1810
        %2582 = vmatmul.mubr.bf16.gmra.mxu0 %v1809
        %v2583 = vpop.f32.mrf.mxu0
        %v2584 = vadd.f32 %v2523, %v2583
        %v2585 = vpop.f32.mrf.mxu0
        %v2586 = vadd.f32 %v2525, %v2585
        %v2587 = vpop.f32.mrf.mxu0
        %v2588 = vpop.f32.mrf.mxu0
        %2589 = vdwg.mxu0
        %2590 = vmatprep.subr.bf16.mxu0 0
        %2591 = vmatpush1.bf16.msra.mxu0 %v2299
        %2592 = vmatprep.subr.bf16.mxu0 0
        %2593 = vmatpush1.bf16.msra.mxu0 %v2296
        %2594 = vmatprep.subr.bf16.mxu0 0
        %2595 = vmatpush1.bf16.msra.mxu0 %v2293
        %2596 = vmatprep.subr.bf16.mxu0 0
        %2597 = vmatpush1.bf16.msra.mxu0 %v2290
        %2598 = vmatprep.subr.bf16.mxu0 0
        %2599 = vmatpush1.bf16.msra.mxu0 %v2287
        %2600 = vmatprep.subr.bf16.mxu0 0
        %2601 = vmatpush1.bf16.msra.mxu0 %v2284
        %2602 = vmatprep.subr.bf16.mxu0 0
        %2603 = vmatpush1.bf16.msra.mxu0 %v2281
        %2604 = vmatprep.subr.bf16.mxu0 0
        %2605 = vmatpush1.bf16.msra.mxu0 %v2278
        %2606 = vmatprep.subr.bf16.mxu0 0
        %2607 = vmatpush2.bf16.msra.mxu0 %v2323
        %2608 = vmatprep.subr.bf16.mxu0 0
        %2609 = vmatpush2.bf16.msra.mxu0 %v2320
        %2610 = vmatprep.subr.bf16.mxu0 0
        %2611 = vmatpush2.bf16.msra.mxu0 %v2317
        %2612 = vmatprep.subr.bf16.mxu0 0
        %2613 = vmatpush2.bf16.msra.mxu0 %v2314
        %2614 = vmatprep.subr.bf16.mxu0 0
        %2615 = vmatpush2.bf16.msra.mxu0 %v2311
        %2616 = vmatprep.subr.bf16.mxu0 0
        %2617 = vmatpush2.bf16.msra.mxu0 %v2308
        %2618 = vmatprep.subr.bf16.mxu0 0
        %2619 = vmatpush2.bf16.msra.mxu0 %v2305
        %2620 = vmatprep.subr.bf16.mxu0 0
        %2621 = vmatpush2.bf16.msra.mxu0 %v2302
        %2622 = vmatprep.mubr.bf16.mxu0 %v1800
        %2623 = vmatmul.mubr.bf16.gmra.mxu0 %v1799
        %v2624 = vpop.f32.mrf.mxu0
        %v2625 = vadd.f32 %v1952, %v2624
        %v2626 = vpop.f32.mrf.mxu0
        %v2627 = vpop.f32.mrf.mxu0
        %v2628 = vadd.f32 %v1952, %v2627
        %v2629 = vpop.f32.mrf.mxu0
        %2630 = vmatprep.mubr.bf16.mxu0 %v1804
        %2631 = vmatmul.mubr.bf16.gmra.mxu0 %v1803
        %v2632 = vpop.f32.mrf.mxu0
        %v2633 = vadd.f32 %v1952, %v2632
        %v2634 = vpop.f32.mrf.mxu0
        %v2635 = vpop.f32.mrf.mxu0
        %v2636 = vadd.f32 %v1952, %v2635
        %v2637 = vpop.f32.mrf.mxu0
        %2638 = vmatprep.mubr.bf16.mxu0 %v1808
        %2639 = vmatmul.mubr.bf16.gmra.mxu0 %v1807
        %v2640 = vpop.f32.mrf.mxu0
        %v2641 = vadd.f32 %v1952, %v2640
        %v2642 = vpop.f32.mrf.mxu0
        %v2643 = vpop.f32.mrf.mxu0
        %v2644 = vpop.f32.mrf.mxu0
        %2645 = vdwg.mxu0
        %2646 = vmatprep.subr.bf16.mxu0 0
        %2647 = vmatpush1.bf16.msra.mxu0 %v2347
        %2648 = vmatprep.subr.bf16.mxu0 0
        %2649 = vmatpush1.bf16.msra.mxu0 %v2344
        %2650 = vmatprep.subr.bf16.mxu0 0
        %2651 = vmatpush1.bf16.msra.mxu0 %v2341
        %2652 = vmatprep.subr.bf16.mxu0 0
        %2653 = vmatpush1.bf16.msra.mxu0 %v2338
        %2654 = vmatprep.subr.bf16.mxu0 0
        %2655 = vmatpush1.bf16.msra.mxu0 %v2335
        %2656 = vmatprep.subr.bf16.mxu0 0
        %2657 = vmatpush1.bf16.msra.mxu0 %v2332
        %2658 = vmatprep.subr.bf16.mxu0 0
        %2659 = vmatpush1.bf16.msra.mxu0 %v2329
        %2660 = vmatprep.subr.bf16.mxu0 0
        %2661 = vmatpush1.bf16.msra.mxu0 %v2326
        %2662 = vmatprep.subr.bf16.mxu0 0
        %2663 = vmatpush2.bf16.msra.mxu0 %v2371
        %2664 = vmatprep.subr.bf16.mxu0 0
        %2665 = vmatpush2.bf16.msra.mxu0 %v2368
        %2666 = vmatprep.subr.bf16.mxu0 0
        %2667 = vmatpush2.bf16.msra.mxu0 %v2365
        %2668 = vmatprep.subr.bf16.mxu0 0
        %2669 = vmatpush2.bf16.msra.mxu0 %v2362
        %2670 = vmatprep.subr.bf16.mxu0 0
        %2671 = vmatpush2.bf16.msra.mxu0 %v2359
        %2672 = vmatprep.subr.bf16.mxu0 0
        %2673 = vmatpush2.bf16.msra.mxu0 %v2356
        %2674 = vmatprep.subr.bf16.mxu0 0
        %2675 = vmatpush2.bf16.msra.mxu0 %v2353
        %2676 = vmatprep.subr.bf16.mxu0 0
        %2677 = vmatpush2.bf16.msra.mxu0 %v2350
        %2678 = vmatprep.mubr.bf16.mxu0 %v1802
        %2679 = vmatmul.mubr.bf16.gmra.mxu0 %v1801
        %v2680 = vpop.f32.mrf.mxu0
        %v2681 = vadd.f32 %v2625, %v2680
        %v2682 = vpop.f32.mrf.mxu0
        %v2683 = vpop.f32.mrf.mxu0
        %v2684 = vadd.f32 %v2628, %v2683
        %v2685 = vpop.f32.mrf.mxu0
        %2686 = vmatprep.mubr.bf16.mxu0 %v1806
        %2687 = vmatmul.mubr.bf16.gmra.mxu0 %v1805
        %v2688 = vpop.f32.mrf.mxu0
        %v2689 = vadd.f32 %v2633, %v2688
        %v2690 = vpop.f32.mrf.mxu0
        %v2691 = vpop.f32.mrf.mxu0
        %v2692 = vadd.f32 %v2636, %v2691
        %v2693 = vpop.f32.mrf.mxu0
        %2694 = vmatprep.mubr.bf16.mxu0 %v1810
        %2695 = vmatmul.mubr.bf16.gmra.mxu0 %v1809
        %v2696 = vpop.f32.mrf.mxu0
        %v2697 = vadd.f32 %v2641, %v2696
        %v2698 = vpop.f32.mrf.mxu0
        %v2699 = vpop.f32.mrf.mxu0
        %v2700 = vpop.f32.mrf.mxu0
        %2701 = vdwg.mxu0
        %v2702 = vxor.u32 %v2564, 2147483648
        %v2703 = vxor.u32 %v2568, 2147483648
        %v2704 = vxor.u32 %v2574, 2147483648
        %v2705 = vxor.u32 %v2578, 2147483648
        %v2706 = vxor.u32 %v2584, 2147483648
        %v2707 = vmul.f32 %v2702, 1.442695
        %v2708 = vpow.pop %v2707
        %v2709 = vmul.f32 %v2703, 1.442695
        %v2710 = vpow.pop %v2709
        %v2711 = vmul.f32 %v2704, 1.442695
        %v2712 = vpow.pop %v2711
        %v2713 = vmul.f32 %v2705, 1.442695
        %v2714 = vpow.pop %v2713
        %v2715 = vmul.f32 %v2706, 1.442695
        %v2716 = vpow.pop %v2715
        %v2717 = vadd.f32 %v2708, 1.0
        %v2718 = vadd.f32 %v2710, 1.0
        %v2719 = vadd.f32 %v2712, 1.0
        %v2720 = vadd.f32 %v2714, 1.0
        %v2721 = vadd.f32 %v2716, 1.0
        %v2722 = vrcp.pop %v2717
        %v2723 = vmul.f32 1.0, %v2722
        %v2724 = vrcp.pop %v2718
        %v2725 = vmul.f32 1.0, %v2724
        %v2726 = vrcp.pop %v2719
        %v2727 = vmul.f32 1.0, %v2726
        %v2728 = vrcp.pop %v2720
        %v2729 = vmul.f32 1.0, %v2728
        %v2730 = vrcp.pop %v2721
        %v2731 = vmul.f32 1.0, %v2730
        %v2732 = vtanh.pop %v2566
        %v2733 = vtanh.pop %v2570
        %v2734 = vtanh.pop %v2576
        %v2735 = vtanh.pop %v2580
        %v2736 = vtanh.pop %v2586
        %v2737 = vxor.u32 %v2681, 2147483648
        %v2738 = vxor.u32 %v2684, 2147483648
        %v2739 = vxor.u32 %v2689, 2147483648
        %v2740 = vxor.u32 %v2692, 2147483648
        %v2741 = vxor.u32 %v2697, 2147483648
        %v2742 = vmul.f32 %v2737, 1.442695
        %v2743 = vpow.pop %v2742
        %v2744 = vmul.f32 %v2738, 1.442695
        %v2745 = vpow.pop %v2744
        %v2746 = vmul.f32 %v2739, 1.442695
        %v2747 = vpow.pop %v2746
        %v2748 = vmul.f32 %v2740, 1.442695
        %v2749 = vpow.pop %v2748
        %v2750 = vmul.f32 %v2741, 1.442695
        %v2751 = vpow.pop %v2750
        %v2752 = vadd.f32 %v2743, 1.0
        %v2753 = vadd.f32 %v2745, 1.0
        %v2754 = vadd.f32 %v2747, 1.0
        %v2755 = vadd.f32 %v2749, 1.0
        %v2756 = vadd.f32 %v2751, 1.0
        %v2757 = vrcp.pop %v2752
        %v2758 = vmul.f32 1.0, %v2757
        %v2759 = vrcp.pop %v2753
        %v2760 = vmul.f32 1.0, %v2759
        %v2761 = vrcp.pop %v2754
        %v2762 = vmul.f32 1.0, %v2761
        %v2763 = vrcp.pop %v2755
        %v2764 = vmul.f32 1.0, %v2763
        %v2765 = vrcp.pop %v2756
        %v2766 = vmul.f32 1.0, %v2765
        %v2767 = vmul.f32 %v2723, %v2732
        %v2768 = vmul.f32 %v2725, %v2733
        %v2769 = vmul.f32 %v2727, %v2734
        %v2770 = vmul.f32 %v2729, %v2735
        %v2771 = vmul.f32 %v2731, %v2736
        %v2772 = vtanh.pop %v2767
        %v2773 = vtanh.pop %v2768
        %v2774 = vtanh.pop %v2769
        %v2775 = vtanh.pop %v2770
        %v2776 = vtanh.pop %v2771
        %v2777 = vmul.f32 %v2758, %v2772
        %v2778 = vmul.f32 %v2760, %v2773
        %v2779 = vmul.f32 %v2762, %v2774
        %v2780 = vmul.f32 %v2764, %v2775
        %v2781 = vmul.f32 %v2766, %v2776
        %2782 = vst [vmem:[%s352] sm:$0xff] %v2777
        %2783 = vst [vmem:[%s352 + $0x8] sm:$0xff] %v2778
        %2784 = vst [vmem:[%s352 + $0x10] sm:$0xff] %v2779
        %2785 = vst [vmem:[%s352 + $0x18] sm:$0xff] %v2780
        %2786 = vst [vmem:[%s352 + $0x20] sm:$0xff] %v2781
        %s2787 = sand.u32 %s186, 1
        %s2788 = scalar_lea.sflag [#allocation4], %s2787
        %s2789 = sand.u32 %s186, 1
        %s2790 = smul.addr %s2789, 40
        %s2791 = scalar_lea.vmem [#allocation11], %s2790
        // Predicated region
        $region69: #{tpu_custom_call.1} parent=47 // pred_check
          %p2792 = pneg %p196
        $region70: #{tpu_custom_call.1} parent=47 // pred_check_branch
          %2794 = sbr.rel (%p2792) target = $region72
        $region71: #{tpu_custom_call.1} parent=47 // pred_region
          %s2795 = smul.u32 5, %s26
          %s2797 = ssub.s32 640, 640
          %2798 = vsyncadd %s2788, %s2797
          %s2799 = smul.addr %s2795, 128
          %s2800 = scalar_lea.hbm %s7, %s2799
          %s2801 = sshll.u32 %s2791, 4
          %s2802 = int_to_ptr.vmem [resolvable:$true] %s2801
          %2807 = dma.vmem_to_hbm [thread:$0]  %s2802, 640, %s2800, %s2788, 128, 128, 8
        $region72: #{tpu_custom_call.1} parent=47 // pred_fallthru
          _
      $region48: #{tpu_custom_call.1} parent=5 // pred_fallthru
        _
      %p2808 = scmp.le.s32.totalorder 2, %s21
      // Predicated region
      $region73: #{tpu_custom_call.1} parent=5 // pred_check
        %p2809 = pneg %p2808
      $region74: #{tpu_custom_call.1} parent=5 // pred_check_branch
        %2811 = sbr.rel (%p2809) target = $region76
      $region75: #{tpu_custom_call.1} parent=5 // pred_region
        %s2812 = ssub.s32 %s21, 2
        // Predicated region
        $region77: #{tpu_custom_call.1} parent=75 // pred_check
          %p2813 = pneg %p202
        $region78: #{tpu_custom_call.1} parent=75 // pred_check_branch
          %2815 = sbr.rel (%p2813) target = $region80
        $region79: #{tpu_custom_call.1} parent=75 // pred_region
          %s2816 = sand.u32 %s187, 1
          %s2817 = scalar_lea.sflag [#allocation4], %s2816
          %s2818 = sand.u32 %s187, 1
          %s2819 = smul.addr %s2818, 40
          %s2820 = scalar_lea.vmem [#allocation11], %s2819
          %2821 = dma.done %s2817, 640
        $region80: #{tpu_custom_call.1} parent=75 // pred_fallthru
          _
      $region76: #{tpu_custom_call.1} parent=5 // pred_fallthru
        _
    $region6: #{tpu_custom_call.1} parent=1 // loop_footer
      %s25 = sadd.s32 1, %s21
    $region7: #{tpu_custom_call.1} parent=1 // loop_footer_branch
      %20 = sbr.rel target = $region3
    $region8: #{tpu_custom_call.1} parent=1 // loop_exit
      _
    %2822 = vsyncpa [#allocation3], 1
    %s2823 = scalar_lea.sflag [#allocation3], 1
    %2824 = vsyncpa %s2823, 1
    %2825 = vsyncpa [#allocation6], 1
    %2826 = vsyncpa [#allocation9], 1
    %2827 = vsyncpa [#allocation4], 1
    %s2828 = scalar_lea.sflag [#allocation4], 1
    %2829 = vsyncpa %s2828, 1

</llo_original>
